<compile_context>
chip_gen: v7x
topology: tpu7x:2x2x1
jax: 0.10.0
libtpu: 0.0.40
codegen_flags: <defaults>
</compile_context>

<pallas_src>
import math

import jax
import jax.numpy as jnp
import numpy as np
from jax import lax
from jax.experimental import pallas as pl
from jax.experimental.pallas import tpu as pltpu

# ---- problem sizes (small, consistent with the module) ----
B = 2             # batch
S = 8             # sequence length
D = 32            # hidden_size
H = 4             # num_heads
DH = D // H       # head dim = 8
MLP_MULT = 4.0
DFF = int(D * MLP_MULT)   # 128
EPS = 1e-6
BS = B * S        # 16 rows processed together

# ---- packed-buffer layouts (host side) ----
# Weight slab: (D, 256)
#   lanes [  0: 32] = Wq * 1/sqrt(DH)
#   lanes [ 32: 64] = Wk
#   lanes [ 64: 96] = Wv
#   lanes [ 96:128] = zero pad (keeps W1 lane-aligned at 128)
#   lanes [128:256] = W1
WPACK_LANES = 256
W1_OFF = 128
# Vector/mask slab: (32, 128)
R_LN1_G, R_LN1_B, R_LN2_G, R_LN2_B, R_B2, R_B1 = 0, 1, 2, 3, 4, 5
R_HMASK = 6          # rows 6..9  : per-head output lane masks, lanes [0:D]
R_AMASK = 16         # rows 16..31: additive block-diagonal attn mask, lanes [0:BS]
VEC_ROWS = 32


def _layer_norm(x, gamma, beta):
    # x: (N, D); biased variance, eps inside sqrt — matches torch LayerNorm
    mu = jnp.mean(x, axis=-1, keepdims=True)
    var = jnp.mean((x - mu) ** 2, axis=-1, keepdims=True)
    return (x - mu) * lax.rsqrt(var + EPS) * gamma + beta


def dit_block_kernel(x_ref, vec_ref, wpack_ref, w2_ref, out_ref):
    f32 = jnp.float32
    x = x_ref[...].astype(f32)                               # (BS, D)

    # ---- unpack the small-vector slab with static slices (no extra DMAs) ----
    ln1_g = vec_ref[R_LN1_G:R_LN1_G + 1, 0:D]
    ln1_b = vec_ref[R_LN1_B:R_LN1_B + 1, 0:D]
    ln2_g = vec_ref[R_LN2_G:R_LN2_G + 1, 0:D]
    ln2_b = vec_ref[R_LN2_B:R_LN2_B + 1, 0:D]
    b2 = vec_ref[R_B2:R_B2 + 1, 0:D]
    b1 = vec_ref[R_B1:R_B1 + 1, 0:DFF]
    amask = vec_ref[R_AMASK:R_AMASK + BS, 0:BS]              # (BS, BS) additive mask

    # ---- LayerNorm 1 + packed QKV projection (single lane-dense GEMM) ----
    xn = _layer_norm(x, ln1_g, ln1_b)                        # (BS, D)
    qkv = jnp.dot(xn, wpack_ref[:, 0:3 * D],
                  preferred_element_type=f32)                # (BS, 3D) = (16, 96)
    q_all = qkv[:, 0:D]                                      # 1/sqrt(DH) pre-folded
    k_all = qkv[:, D:2 * D]
    v_all = qkv[:, 2 * D:3 * D]
    kT = k_all.T                                             # (D, BS): the ONE transpose

    # ---- attention, per head (H=4, statically unrolled) ----
    attn = jnp.zeros((BS, D), f32)
    for h in range(H):
        q_h = q_all[:, h * DH:(h + 1) * DH]                  # (BS, DH)
        kT_h = kT[h * DH:(h + 1) * DH, :]                    # (DH, BS) — no transpose in dot
        s = jnp.dot(q_h, kT_h, preferred_element_type=f32) + amask   # (BS, BS)
        s = s - jnp.max(s, axis=-1, keepdims=True)
        p = jnp.exp(s)                                       # masked entries underflow to 0
        p = p / jnp.sum(p, axis=-1, keepdims=True)           # exact reciprocal (costs nothing)
        # Zero every lane outside head h's block so p @ v_wide lands directly
        # in the merged (BS, D) layout; heads combine by summation, no concat.
        hmask = vec_ref[R_HMASK + h:R_HMASK + h + 1, 0:D]    # (1, D) 0/1 lane mask
        attn = attn + jnp.dot(p, v_all * hmask, preferred_element_type=f32)

    x1 = x + attn                                            # residual 1

    # ---- LayerNorm 2 + MLP (Linear -> exact-erf GELU -> Linear) ----
    xn2 = _layer_norm(x1, ln2_g, ln2_b)
    h1 = jnp.dot(xn2, wpack_ref[:, W1_OFF:W1_OFF + DFF],
                 preferred_element_type=f32) + b1            # (BS, DFF)
    h1 = 0.5 * h1 * (1.0 + lax.erf(h1 * (1.0 / math.sqrt(2.0))))   # exact GELU (torch default)
    h2 = jnp.dot(h1, w2_ref[...], preferred_element_type=f32) + b2

    out_ref[...] = (x1 + h2).astype(out_ref.dtype)           # residual 2


def _pack_params(params):
    """Host-side layout plumbing: fold scale into Wq, pack everything into
    one weight slab + one vector/mask slab (plus W2)."""
    (ln1_g, ln1_b, w_qkv, ln2_g, ln2_b, w1, b1, w2, b2) = [
        np.asarray(p, np.float32) for p in params]

    scale = 1.0 / math.sqrt(DH)
    wpack = np.zeros((D, WPACK_LANES), np.float32)
    wpack[:, 0:D] = w_qkv[:, 0:D] * scale
    wpack[:, D:2 * D] = w_qkv[:, D:2 * D]
    wpack[:, 2 * D:3 * D] = w_qkv[:, 2 * D:3 * D]
    wpack[:, W1_OFF:W1_OFF + DFF] = w1

    vec = np.zeros((VEC_ROWS, 128), np.float32)
    vec[R_LN1_G, 0:D] = ln1_g.reshape(-1)
    vec[R_LN1_B, 0:D] = ln1_b.reshape(-1)
    vec[R_LN2_G, 0:D] = ln2_g.reshape(-1)
    vec[R_LN2_B, 0:D] = ln2_b.reshape(-1)
    vec[R_B2, 0:D] = b2.reshape(-1)
    vec[R_B1, 0:DFF] = b1.reshape(-1)
    for h in range(H):
        vec[R_HMASK + h, h * DH:(h + 1) * DH] = 1.0
    tok_batch = np.arange(BS) // S
    vec[R_AMASK:R_AMASK + BS, 0:BS] = np.where(
        tok_batch[:, None] == tok_batch[None, :], 0.0, -1e30).astype(np.float32)

    return jnp.asarray(vec), jnp.asarray(wpack), jnp.asarray(w2)


def dit_block_no_ada(x, params):
    vec, wpack, w2 = _pack_params(params)
    x_flat = x.reshape(BS, D)

    vmem = pl.BlockSpec(memory_space=pltpu.MemorySpace.VMEM)
    out_flat = pl.pallas_call(
        dit_block_kernel,
        out_shape=jax.ShapeDtypeStruct((BS, D), x.dtype),
        in_specs=[vmem, vmem, vmem, vmem],
        out_specs=vmem,
    )(x_flat, vec, wpack, w2)

    return out_flat.reshape(B, S, D)


def reference(x, params):
    """Pure-JAX reference matching the PyTorch module."""
    (ln1_g, ln1_b, w_qkv, ln2_g, ln2_b, w1, b1, w2, b2) = params

    def ln(y, g, b):
        mu = y.mean(-1, keepdims=True)
        var = ((y - mu) ** 2).mean(-1, keepdims=True)
        return (y - mu) / jnp.sqrt(var + EPS) * g + b

    xn = ln(x, ln1_g, ln1_b)
    qkv = xn @ w_qkv                                         # (B, S, 3D)
    q, k, v = jnp.split(qkv, 3, axis=-1)
    reshape_h = lambda t: t.reshape(B, S, H, DH).transpose(0, 2, 1, 3)
    q, k, v = map(reshape_h, (q, k, v))                      # (B, H, S, DH)
    scores = jnp.einsum("bhqd,bhkd->bhqk", q, k) / math.sqrt(DH)
    p = jax.nn.softmax(scores, axis=-1)
    attn = jnp.einsum("bhqk,bhkd->bhqd", p, v)
    attn = attn.transpose(0, 2, 1, 3).reshape(B, S, D)
    x = x + attn

    xn = ln(x, ln2_g, ln2_b)
    h1 = xn @ w1 + b1
    h1 = 0.5 * h1 * (1.0 + lax.erf(h1 / math.sqrt(2.0)))
    h2 = h1 @ w2 + b2
    return x + h2


def make_params(key):
    ks = jax.random.split(key, 6)
    scale = 0.05
    ln1_g = jnp.ones((1, D), jnp.float32)
    ln1_b = jnp.zeros((1, D), jnp.float32)
    ln2_g = jnp.ones((1, D), jnp.float32)
    ln2_b = jnp.zeros((1, D), jnp.float32)
    w_qkv = scale * jax.random.normal(ks[0], (D, 3 * D), jnp.float32)
    w1 = scale * jax.random.normal(ks[1], (D, DFF), jnp.float32)
    b1 = scale * jax.random.normal(ks[2], (1, DFF), jnp.float32)
    w2 = scale * jax.random.normal(ks[3], (DFF, D), jnp.float32)
    b2 = scale * jax.random.normal(ks[4], (1, D), jnp.float32)
    return (ln1_g, ln1_b, w_qkv, ln2_g, ln2_b, w1, b1, w2, b2)


if __name__ == "__main__":
    key = jax.random.PRNGKey(0)
    kx, kp = jax.random.split(key)
    x = jax.random.normal(kx, (B, S, D), jnp.float32)
    params = make_params(kp)

    out = jax.block_until_ready(dit_block_no_ada(x, params))
    ref = jax.block_until_ready(reference(x, params))

    # All math is f32 with exact reciprocal, so tolerance is tight again.
    np.testing.assert_allclose(np.asarray(out), np.asarray(ref),
                               rtol=1e-4, atol=1e-4)
    print("KERNEL_OK")
</pallas_src>

<mosaic_0001>
module attributes {stable_mosaic.version = 11 : i64} {
  func.func @dit_block_kernel(%arg0: memref<16x32xf32, #tpu.memory_space<vmem>>, %arg1: memref<32x128xf32, #tpu.memory_space<vmem>>, %arg2: memref<32x256xf32, #tpu.memory_space<vmem>>, %arg3: memref<128x32xf32, #tpu.memory_space<vmem>>, %arg4: memref<16x32xf32, #tpu.memory_space<vmem>>) attributes {dimension_semantics = [], scalar_prefetch = 0 : i64, scratch_operands = 0 : i64, tpu.core_type = #tpu.core_type<tc>} {
    %c0 = arith.constant 0 : index
    %c0_0 = arith.constant 0 : index
    %0 = vector.load %arg0[%c0, %c0_0] : memref<16x32xf32, #tpu.memory_space<vmem>>, vector<16x32xf32>
    %c0_1 = arith.constant 0 : index
    %c0_2 = arith.constant 0 : index
    %1 = vector.load %arg1[%c0_1, %c0_2] : memref<32x128xf32, #tpu.memory_space<vmem>>, vector<1x32xf32>
    %c1 = arith.constant 1 : index
    %c0_3 = arith.constant 0 : index
    %2 = vector.load %arg1[%c1, %c0_3] : memref<32x128xf32, #tpu.memory_space<vmem>>, vector<1x32xf32>
    %c2 = arith.constant 2 : index
    %c0_4 = arith.constant 0 : index
    %3 = vector.load %arg1[%c2, %c0_4] : memref<32x128xf32, #tpu.memory_space<vmem>>, vector<1x32xf32>
    %c3 = arith.constant 3 : index
    %c0_5 = arith.constant 0 : index
    %4 = vector.load %arg1[%c3, %c0_5] : memref<32x128xf32, #tpu.memory_space<vmem>>, vector<1x32xf32>
    %c4 = arith.constant 4 : index
    %c0_6 = arith.constant 0 : index
    %5 = vector.load %arg1[%c4, %c0_6] : memref<32x128xf32, #tpu.memory_space<vmem>>, vector<1x32xf32>
    %c5 = arith.constant 5 : index
    %c0_7 = arith.constant 0 : index
    %6 = vector.load %arg1[%c5, %c0_7] : memref<32x128xf32, #tpu.memory_space<vmem>>, vector<1x128xf32>
    %c16 = arith.constant 16 : index
    %c0_8 = arith.constant 0 : index
    %7 = vector.load %arg1[%c16, %c0_8] : memref<32x128xf32, #tpu.memory_space<vmem>>, vector<16x16xf32>
    %cst = arith.constant dense<0.000000e+00> : vector<16xf32>
    %8 = vector.multi_reduction <add>, %0, %cst [1] : vector<16x32xf32> to vector<16xf32>
    %9 = vector.shape_cast %8 : vector<16xf32> to vector<16x1xf32>
    %cst_9 = arith.constant 3.200000e+01 : f32
    %10 = vector.broadcast %cst_9 : f32 to vector<16x1xf32>
    %11 = arith.divf %9, %10 : vector<16x1xf32>
    %12 = vector.broadcast %11 : vector<16x1xf32> to vector<16x32xf32>
    %13 = arith.subf %0, %12 : vector<16x32xf32>
    %14 = arith.mulf %13, %13 : vector<16x32xf32>
    %cst_10 = arith.constant dense<0.000000e+00> : vector<16xf32>
    %15 = vector.multi_reduction <add>, %14, %cst_10 [1] : vector<16x32xf32> to vector<16xf32>
    %16 = vector.shape_cast %15 : vector<16xf32> to vector<16x1xf32>
    %cst_11 = arith.constant 3.200000e+01 : f32
    %17 = vector.broadcast %cst_11 : f32 to vector<16x1xf32>
    %18 = arith.divf %16, %17 : vector<16x1xf32>
    %19 = vector.broadcast %11 : vector<16x1xf32> to vector<16x32xf32>
    %20 = arith.subf %0, %19 : vector<16x32xf32>
    %cst_12 = arith.constant 9.99999997E-7 : f32
    %21 = vector.broadcast %cst_12 : f32 to vector<16x1xf32>
    %22 = arith.addf %18, %21 : vector<16x1xf32>
    %23 = math.rsqrt %22 : vector<16x1xf32>
    %24 = vector.broadcast %23 : vector<16x1xf32> to vector<16x32xf32>
    %25 = arith.mulf %20, %24 : vector<16x32xf32>
    %26 = vector.broadcast %1 : vector<1x32xf32> to vector<16x32xf32>
    %27 = arith.mulf %25, %26 : vector<16x32xf32>
    %28 = vector.broadcast %2 : vector<1x32xf32> to vector<16x32xf32>
    %29 = arith.addf %27, %28 : vector<16x32xf32>
    %c0_13 = arith.constant 0 : index
    %c0_14 = arith.constant 0 : index
    %30 = vector.load %arg2[%c0_13, %c0_14] : memref<32x256xf32, #tpu.memory_space<vmem>>, vector<32x96xf32>
    %cst_15 = arith.constant dense<0.000000e+00> : vector<16x96xf32>
    %31 = tpu.matmul %29, %30, %cst_15 {dimension_numbers = #tpu.dot_dimension_numbers<[1], [0], [0], [1], [0, 0, 1, 1], [], []>} : vector<16x32xf32>, vector<32x96xf32>, vector<16x96xf32> -> vector<16x96xf32>
    %32 = vector.extract_strided_slice %31 {offsets = [0, 0], sizes = [16, 32], strides = [1, 1]} : vector<16x96xf32> to vector<16x32xf32>
    %33 = vector.extract_strided_slice %31 {offsets = [0, 32], sizes = [16, 32], strides = [1, 1]} : vector<16x96xf32> to vector<16x32xf32>
    %34 = vector.extract_strided_slice %31 {offsets = [0, 64], sizes = [16, 32], strides = [1, 1]} : vector<16x96xf32> to vector<16x32xf32>
    %35 = tpu.transpose %33, [1, 0] : vector<16x32xf32> -> vector<32x16xf32>
    %cst_16 = arith.constant 0.000000e+00 : f32
    %36 = vector.broadcast %cst_16 : f32 to vector<16x32xf32>
    %37 = vector.extract_strided_slice %32 {offsets = [0, 0], sizes = [16, 8], strides = [1, 1]} : vector<16x32xf32> to vector<16x8xf32>
    %38 = vector.extract_strided_slice %35 {offsets = [0, 0], sizes = [8, 16], strides = [1, 1]} : vector<32x16xf32> to vector<8x16xf32>
    %cst_17 = arith.constant dense<0.000000e+00> : vector<16x16xf32>
    %39 = tpu.matmul %37, %38, %cst_17 {dimension_numbers = #tpu.dot_dimension_numbers<[1], [0], [0], [1], [0, 0, 1, 1], [], []>} : vector<16x8xf32>, vector<8x16xf32>, vector<16x16xf32> -> vector<16x16xf32>
    %40 = arith.addf %39, %7 : vector<16x16xf32>
    %cst_18 = arith.constant dense<0xFF800000> : vector<16xf32>
    %41 = vector.multi_reduction <maximumf>, %40, %cst_18 [1] : vector<16x16xf32> to vector<16xf32>
    %42 = vector.shape_cast %41 : vector<16xf32> to vector<16x1xf32>
    %43 = vector.broadcast %42 : vector<16x1xf32> to vector<16x16xf32>
    %44 = arith.subf %40, %43 : vector<16x16xf32>
    %45 = math.exp %44 : vector<16x16xf32>
    %cst_19 = arith.constant dense<0.000000e+00> : vector<16xf32>
    %46 = vector.multi_reduction <add>, %45, %cst_19 [1] : vector<16x16xf32> to vector<16xf32>
    %47 = vector.shape_cast %46 : vector<16xf32> to vector<16x1xf32>
    %48 = vector.broadcast %47 : vector<16x1xf32> to vector<16x16xf32>
    %49 = arith.divf %45, %48 : vector<16x16xf32>
    %c6 = arith.constant 6 : index
    %c0_20 = arith.constant 0 : index
    %50 = vector.load %arg1[%c6, %c0_20] : memref<32x128xf32, #tpu.memory_space<vmem>>, vector<1x32xf32>
    %51 = vector.broadcast %50 : vector<1x32xf32> to vector<16x32xf32>
    %52 = arith.mulf %34, %51 : vector<16x32xf32>
    %cst_21 = arith.constant dense<0.000000e+00> : vector<16x32xf32>
    %53 = tpu.matmul %49, %52, %cst_21 {dimension_numbers = #tpu.dot_dimension_numbers<[1], [0], [0], [1], [0, 0, 1, 1], [], []>} : vector<16x16xf32>, vector<16x32xf32>, vector<16x32xf32> -> vector<16x32xf32>
    %54 = arith.addf %36, %53 : vector<16x32xf32>
    %55 = vector.extract_strided_slice %32 {offsets = [0, 8], sizes = [16, 8], strides = [1, 1]} : vector<16x32xf32> to vector<16x8xf32>
    %56 = vector.extract_strided_slice %35 {offsets = [8, 0], sizes = [8, 16], strides = [1, 1]} : vector<32x16xf32> to vector<8x16xf32>
    %cst_22 = arith.constant dense<0.000000e+00> : vector<16x16xf32>
    %57 = tpu.matmul %55, %56, %cst_22 {dimension_numbers = #tpu.dot_dimension_numbers<[1], [0], [0], [1], [0, 0, 1, 1], [], []>} : vector<16x8xf32>, vector<8x16xf32>, vector<16x16xf32> -> vector<16x16xf32>
    %58 = arith.addf %57, %7 : vector<16x16xf32>
    %cst_23 = arith.constant dense<0xFF800000> : vector<16xf32>
    %59 = vector.multi_reduction <maximumf>, %58, %cst_23 [1] : vector<16x16xf32> to vector<16xf32>
    %60 = vector.shape_cast %59 : vector<16xf32> to vector<16x1xf32>
    %61 = vector.broadcast %60 : vector<16x1xf32> to vector<16x16xf32>
    %62 = arith.subf %58, %61 : vector<16x16xf32>
    %63 = math.exp %62 : vector<16x16xf32>
    %cst_24 = arith.constant dense<0.000000e+00> : vector<16xf32>
    %64 = vector.multi_reduction <add>, %63, %cst_24 [1] : vector<16x16xf32> to vector<16xf32>
    %65 = vector.shape_cast %64 : vector<16xf32> to vector<16x1xf32>
    %66 = vector.broadcast %65 : vector<16x1xf32> to vector<16x16xf32>
    %67 = arith.divf %63, %66 : vector<16x16xf32>
    %c7 = arith.constant 7 : index
    %c0_25 = arith.constant 0 : index
    %68 = vector.load %arg1[%c7, %c0_25] : memref<32x128xf32, #tpu.memory_space<vmem>>, vector<1x32xf32>
    %69 = vector.broadcast %68 : vector<1x32xf32> to vector<16x32xf32>
    %70 = arith.mulf %34, %69 : vector<16x32xf32>
    %cst_26 = arith.constant dense<0.000000e+00> : vector<16x32xf32>
    %71 = tpu.matmul %67, %70, %cst_26 {dimension_numbers = #tpu.dot_dimension_numbers<[1], [0], [0], [1], [0, 0, 1, 1], [], []>} : vector<16x16xf32>, vector<16x32xf32>, vector<16x32xf32> -> vector<16x32xf32>
    %72 = arith.addf %54, %71 : vector<16x32xf32>
    %73 = vector.extract_strided_slice %32 {offsets = [0, 16], sizes = [16, 8], strides = [1, 1]} : vector<16x32xf32> to vector<16x8xf32>
    %74 = vector.extract_strided_slice %35 {offsets = [16, 0], sizes = [8, 16], strides = [1, 1]} : vector<32x16xf32> to vector<8x16xf32>
    %cst_27 = arith.constant dense<0.000000e+00> : vector<16x16xf32>
    %75 = tpu.matmul %73, %74, %cst_27 {dimension_numbers = #tpu.dot_dimension_numbers<[1], [0], [0], [1], [0, 0, 1, 1], [], []>} : vector<16x8xf32>, vector<8x16xf32>, vector<16x16xf32> -> vector<16x16xf32>
    %76 = arith.addf %75, %7 : vector<16x16xf32>
    %cst_28 = arith.constant dense<0xFF800000> : vector<16xf32>
    %77 = vector.multi_reduction <maximumf>, %76, %cst_28 [1] : vector<16x16xf32> to vector<16xf32>
    %78 = vector.shape_cast %77 : vector<16xf32> to vector<16x1xf32>
    %79 = vector.broadcast %78 : vector<16x1xf32> to vector<16x16xf32>
    %80 = arith.subf %76, %79 : vector<16x16xf32>
    %81 = math.exp %80 : vector<16x16xf32>
    %cst_29 = arith.constant dense<0.000000e+00> : vector<16xf32>
    %82 = vector.multi_reduction <add>, %81, %cst_29 [1] : vector<16x16xf32> to vector<16xf32>
    %83 = vector.shape_cast %82 : vector<16xf32> to vector<16x1xf32>
    %84 = vector.broadcast %83 : vector<16x1xf32> to vector<16x16xf32>
    %85 = arith.divf %81, %84 : vector<16x16xf32>
    %c8 = arith.constant 8 : index
    %c0_30 = arith.constant 0 : index
    %86 = vector.load %arg1[%c8, %c0_30] : memref<32x128xf32, #tpu.memory_space<vmem>>, vector<1x32xf32>
    %87 = vector.broadcast %86 : vector<1x32xf32> to vector<16x32xf32>
    %88 = arith.mulf %34, %87 : vector<16x32xf32>
    %cst_31 = arith.constant dense<0.000000e+00> : vector<16x32xf32>
    %89 = tpu.matmul %85, %88, %cst_31 {dimension_numbers = #tpu.dot_dimension_numbers<[1], [0], [0], [1], [0, 0, 1, 1], [], []>} : vector<16x16xf32>, vector<16x32xf32>, vector<16x32xf32> -> vector<16x32xf32>
    %90 = arith.addf %72, %89 : vector<16x32xf32>
    %91 = vector.extract_strided_slice %32 {offsets = [0, 24], sizes = [16, 8], strides = [1, 1]} : vector<16x32xf32> to vector<16x8xf32>
    %92 = vector.extract_strided_slice %35 {offsets = [24, 0], sizes = [8, 16], strides = [1, 1]} : vector<32x16xf32> to vector<8x16xf32>
    %cst_32 = arith.constant dense<0.000000e+00> : vector<16x16xf32>
    %93 = tpu.matmul %91, %92, %cst_32 {dimension_numbers = #tpu.dot_dimension_numbers<[1], [0], [0], [1], [0, 0, 1, 1], [], []>} : vector<16x8xf32>, vector<8x16xf32>, vector<16x16xf32> -> vector<16x16xf32>
    %94 = arith.addf %93, %7 : vector<16x16xf32>
    %cst_33 = arith.constant dense<0xFF800000> : vector<16xf32>
    %95 = vector.multi_reduction <maximumf>, %94, %cst_33 [1] : vector<16x16xf32> to vector<16xf32>
    %96 = vector.shape_cast %95 : vector<16xf32> to vector<16x1xf32>
    %97 = vector.broadcast %96 : vector<16x1xf32> to vector<16x16xf32>
    %98 = arith.subf %94, %97 : vector<16x16xf32>
    %99 = math.exp %98 : vector<16x16xf32>
    %cst_34 = arith.constant dense<0.000000e+00> : vector<16xf32>
    %100 = vector.multi_reduction <add>, %99, %cst_34 [1] : vector<16x16xf32> to vector<16xf32>
    %101 = vector.shape_cast %100 : vector<16xf32> to vector<16x1xf32>
    %102 = vector.broadcast %101 : vector<16x1xf32> to vector<16x16xf32>
    %103 = arith.divf %99, %102 : vector<16x16xf32>
    %c9 = arith.constant 9 : index
    %c0_35 = arith.constant 0 : index
    %104 = vector.load %arg1[%c9, %c0_35] : memref<32x128xf32, #tpu.memory_space<vmem>>, vector<1x32xf32>
    %105 = vector.broadcast %104 : vector<1x32xf32> to vector<16x32xf32>
    %106 = arith.mulf %34, %105 : vector<16x32xf32>
    %cst_36 = arith.constant dense<0.000000e+00> : vector<16x32xf32>
    %107 = tpu.matmul %103, %106, %cst_36 {dimension_numbers = #tpu.dot_dimension_numbers<[1], [0], [0], [1], [0, 0, 1, 1], [], []>} : vector<16x16xf32>, vector<16x32xf32>, vector<16x32xf32> -> vector<16x32xf32>
    %108 = arith.addf %90, %107 : vector<16x32xf32>
    %109 = arith.addf %0, %108 : vector<16x32xf32>
    %cst_37 = arith.constant dense<0.000000e+00> : vector<16xf32>
    %110 = vector.multi_reduction <add>, %109, %cst_37 [1] : vector<16x32xf32> to vector<16xf32>
    %111 = vector.shape_cast %110 : vector<16xf32> to vector<16x1xf32>
    %cst_38 = arith.constant 3.200000e+01 : f32
    %112 = vector.broadcast %cst_38 : f32 to vector<16x1xf32>
    %113 = arith.divf %111, %112 : vector<16x1xf32>
    %114 = vector.broadcast %113 : vector<16x1xf32> to vector<16x32xf32>
    %115 = arith.subf %109, %114 : vector<16x32xf32>
    %116 = arith.mulf %115, %115 : vector<16x32xf32>
    %cst_39 = arith.constant dense<0.000000e+00> : vector<16xf32>
    %117 = vector.multi_reduction <add>, %116, %cst_39 [1] : vector<16x32xf32> to vector<16xf32>
    %118 = vector.shape_cast %117 : vector<16xf32> to vector<16x1xf32>
    %cst_40 = arith.constant 3.200000e+01 : f32
    %119 = vector.broadcast %cst_40 : f32 to vector<16x1xf32>
    %120 = arith.divf %118, %119 : vector<16x1xf32>
    %121 = vector.broadcast %113 : vector<16x1xf32> to vector<16x32xf32>
    %122 = arith.subf %109, %121 : vector<16x32xf32>
    %cst_41 = arith.constant 9.99999997E-7 : f32
    %123 = vector.broadcast %cst_41 : f32 to vector<16x1xf32>
    %124 = arith.addf %120, %123 : vector<16x1xf32>
    %125 = math.rsqrt %124 : vector<16x1xf32>
    %126 = vector.broadcast %125 : vector<16x1xf32> to vector<16x32xf32>
    %127 = arith.mulf %122, %126 : vector<16x32xf32>
    %128 = vector.broadcast %3 : vector<1x32xf32> to vector<16x32xf32>
    %129 = arith.mulf %127, %128 : vector<16x32xf32>
    %130 = vector.broadcast %4 : vector<1x32xf32> to vector<16x32xf32>
    %131 = arith.addf %129, %130 : vector<16x32xf32>
    %c0_42 = arith.constant 0 : index
    %c128 = arith.constant 128 : index
    %132 = vector.load %arg2[%c0_42, %c128] : memref<32x256xf32, #tpu.memory_space<vmem>>, vector<32x128xf32>
    %cst_43 = arith.constant dense<0.000000e+00> : vector<16x128xf32>
    %133 = tpu.matmul %131, %132, %cst_43 {dimension_numbers = #tpu.dot_dimension_numbers<[1], [0], [0], [1], [0, 0, 1, 1], [], []>} : vector<16x32xf32>, vector<32x128xf32>, vector<16x128xf32> -> vector<16x128xf32>
    %134 = vector.broadcast %6 : vector<1x128xf32> to vector<16x128xf32>
    %135 = arith.addf %133, %134 : vector<16x128xf32>
    %cst_44 = arith.constant 5.000000e-01 : f32
    %136 = vector.broadcast %cst_44 : f32 to vector<16x128xf32>
    %137 = arith.mulf %136, %135 : vector<16x128xf32>
    %cst_45 = arith.constant 0.707106769 : f32
    %138 = vector.broadcast %cst_45 : f32 to vector<16x128xf32>
    %139 = arith.mulf %135, %138 : vector<16x128xf32>
    %140 = math.erf %139 : vector<16x128xf32>
    %cst_46 = arith.constant 1.000000e+00 : f32
    %141 = vector.broadcast %cst_46 : f32 to vector<16x128xf32>
    %142 = arith.addf %141, %140 : vector<16x128xf32>
    %143 = arith.mulf %137, %142 : vector<16x128xf32>
    %c0_47 = arith.constant 0 : index
    %c0_48 = arith.constant 0 : index
    %144 = vector.load %arg3[%c0_47, %c0_48] : memref<128x32xf32, #tpu.memory_space<vmem>>, vector<128x32xf32>
    %cst_49 = arith.constant dense<0.000000e+00> : vector<16x32xf32>
    %145 = tpu.matmul %143, %144, %cst_49 {dimension_numbers = #tpu.dot_dimension_numbers<[1], [0], [0], [1], [0, 0, 1, 1], [], []>} : vector<16x128xf32>, vector<128x32xf32>, vector<16x32xf32> -> vector<16x32xf32>
    %146 = vector.broadcast %5 : vector<1x32xf32> to vector<16x32xf32>
    %147 = arith.addf %145, %146 : vector<16x32xf32>
    %148 = arith.addf %109, %147 : vector<16x32xf32>
    %c0_50 = arith.constant 0 : index
    %c0_51 = arith.constant 0 : index
    %149 = vector.load %arg4[%c0_50, %c0_51] : memref<16x32xf32, #tpu.memory_space<vmem>>, vector<16x32xf32>
    tpu.vector_store %arg4[%c0_50, %c0_51], %148 {strides = array<i32>} : memref<16x32xf32, #tpu.memory_space<vmem>>, vector<16x32xf32>,
    return
  }
}

</mosaic_0001>

<llo_original>
// kernel: tpu_custom_call.1
$region0: #{tpu_custom_call.1}
  #allocation0 [shape = 'u32[]', space=smem, size = 0x4, offset = 0x4, fixed_abs, tag = 'smem constant byte address 0x4 - core index']
  #allocation1 [shape = 'u32[144,128]{1,0:T(1,128)}', space=vmem, size = 0x12000, scoped, tag = 'internal scratch']
  %s0 = inlined_call_operand.vmem [shape: f32[16,32], index: 0, kind: input, shape index: {}]
  %s1 = inlined_call_operand.vmem [shape: f32[32,128], index: 1, kind: input, shape index: {}]
  %s2 = inlined_call_operand.vmem [shape: f32[32,256], index: 2, kind: input, shape index: {}]
  %s3 = inlined_call_operand.vmem [shape: f32[128,32], index: 3, kind: input, shape index: {}]
  %s4 = inlined_call_operand.hbm [shape: f32[16,32], index: 4, kind: output, shape index: {}]
  %s5 = sld [smem:[#allocation0]]
  $region26: #{tpu_custom_call.1} parent=0
    _
  %s7 = ssub.s32 1, %s5
  %s8 = scalar_select 0, %s7, %s5
  $region1: #{tpu_custom_call.1} parent=0
    #allocation2 [shape = 'u8[8192]{0}', space=vmem, size = 0x2000, scoped, tag = 'output window, operand 0, single buffered']
    #allocation3 [shape = 's32[1]{0}', space=sflag, size = 0x4, scoped, tag = 'scoped memory for tpu_custom_call.1']
    %9 = vsyncpa [#allocation3], 0
    // Predicated region
    $region2: #{tpu_custom_call.1} parent=1 // pred_check
      _
    $region3: #{tpu_custom_call.1} parent=1 // pred_check_branch
      %11 = sbr.rel (0) target = $region5
    $region4: #{tpu_custom_call.1} parent=1 // pred_region
      _
    $region5: #{tpu_custom_call.1} parent=1 // pred_fallthru
      _
    // Predicated region
    $region6: #{tpu_custom_call.1} parent=1 // pred_check
      _
    $region7: #{tpu_custom_call.1} parent=1 // pred_check_branch
      %13 = sbr.rel (0) target = $region9
    $region8: #{tpu_custom_call.1} parent=1 // pred_region
      _
    $region9: #{tpu_custom_call.1} parent=1 // pred_fallthru
      _
    // Predicated region
    $region10: #{tpu_custom_call.1} parent=1 // pred_check
      _
    $region11: #{tpu_custom_call.1} parent=1 // pred_check_branch
      %15 = sbr.rel (0) target = $region13
    $region12: #{tpu_custom_call.1} parent=1 // pred_region
      _
    $region13: #{tpu_custom_call.1} parent=1 // pred_fallthru
      _
    // Predicated region
    $region14: #{tpu_custom_call.1} parent=1 // pred_check
      _
    $region15: #{tpu_custom_call.1} parent=1 // pred_check_branch
      %17 = sbr.rel (0) target = $region17
    $region16: #{tpu_custom_call.1} parent=1 // pred_region
      _
    $region17: #{tpu_custom_call.1} parent=1 // pred_fallthru
      _
    %v18 = vld [vmem:[%s0] sm:$0xff]
    %v19 = vld [vmem:[%s0 + $0x8] sm:$0xff]
    %v20 = vld [vmem:[%s1] sm:$0x1]
    %v21 = vld [vmem:[%s1 + $0x1] sm:$0x1]
    %v22 = vld [vmem:[%s1 + $0x2] sm:$0x1]
    %v23 = vld [vmem:[%s1 + $0x3] sm:$0x1]
    %v24 = vld [vmem:[%s1 + $0x4] sm:$0x1]
    %v25 = vld [vmem:[%s1 + $0x5] sm:$0x1]
    %v26 = vld [vmem:[%s1 + $0x10] sm:$0xff]
    %v27 = vld [vmem:[%s1 + $0x18] sm:$0xff]
    %vm28 = vcmask 261120
    %v29 = vsel %vm28, %v18, 0.0
    %30 = vadd.xlane.f32.xlu0 %v29
    %v31 = vpop.xlane.xlu0 %30
    %v32 = vsel %vm28, %v19, 0.0
    %33 = vadd.xlane.f32.xlu0 %v32
    %v34 = vpop.xlane.xlu0 %33
    %v35 = vrcp.pop 32.0
    %v36 = vmul.f32 %v31, %v35
    %v37 = vmul.f32 %v34, %v35
    %v38 = vsub.f32 %v18, %v36
    %v39 = vsub.f32 %v19, %v37
    %v40 = vmul.f32 %v38, %v38
    %v41 = vmul.f32 %v39, %v39
    %v42 = vsel %vm28, %v40, 0.0
    %43 = vadd.xlane.f32.xlu0 %v42
    %v44 = vpop.xlane.xlu0 %43
    %v45 = vsel %vm28, %v41, 0.0
    %46 = vadd.xlane.f32.xlu0 %v45
    %v47 = vpop.xlane.xlu0 %46
    %v48 = vmul.f32 %v44, %v35
    %v49 = vmul.f32 %v47, %v35
    %v50 = vadd.f32 %v48, 1e-06
    %v51 = vadd.f32 %v49, 1e-06
    %v52 = vrsqrt.pop %v50
    %v53 = vrsqrt.pop %v51
    %v54 = vmul.f32 %v38, %v52
    %v55 = vmul.f32 %v39, %v53
    %v56 = vlaneseq
    %v57 = vshrl.u32 %v56, 7
    %v58 = vsub.s32 0, %v57
    %v59 = vrot.slane %v20, %v58
    %v60 = vmul.f32 %v54, %v59
    %v61 = vmul.f32 %v55, %v59
    %v62 = vlaneseq
    %v63 = vshrl.u32 %v62, 7
    %v64 = vsub.s32 0, %v63
    %v65 = vrot.slane %v21, %v64
    %v66 = vadd.f32 %v60, %v65
    %v67 = vadd.f32 %v61, %v65
    %v68 = vld [vmem:[%s2] sm:$0xff]
    %v69 = vld [vmem:[%s2 + $0x10] sm:$0xff]
    %v70 = vld [vmem:[%s2 + $0x20] sm:$0xff]
    %v71 = vld [vmem:[%s2 + $0x30] sm:$0xff]
    %v73 = vsel %vm28, %v66, 0
    %v76 = vsel %vm28, %v67, 0
    %78 = vmatprep.subr.mxu0 0.0
    %79 = vmatpush1.msra.mxu0 %v68
    %80 = vmatprep.subr.mxu0 0.0
    %81 = vmatpush1.msra.mxu0 %v69
    %82 = vmatprep.subr.mxu0 0.0
    %83 = vmatpush1.msra.mxu0 %v70
    %84 = vmatprep.subr.mxu0 0.0
    %85 = vmatpush1.msra.mxu0 %v71
    %86 = vmatprep.subr.mxu0 0.0
    %87 = vmatpush1.msra.mxu0 0.0
    %88 = vmatprep.subr.mxu0 0.0
    %89 = vmatpush1.msra.mxu0 0.0
    %90 = vmatprep.subr.mxu0 0.0
    %91 = vmatpush1.msra.mxu0 0.0
    %92 = vmatprep.subr.mxu0 0.0
    %93 = vmatpush1.msra.mxu0 0.0
    %94 = vmatprep.subr.mxu0 0.0
    %95 = vmatpush1.msra.mxu0 0.0
    %96 = vmatprep.subr.mxu0 0.0
    %97 = vmatpush1.msra.mxu0 0.0
    %98 = vmatprep.subr.mxu0 0.0
    %99 = vmatpush1.msra.mxu0 0.0
    %100 = vmatprep.subr.mxu0 0.0
    %101 = vmatpush1.msra.mxu0 0.0
    %102 = vmatprep.subr.mxu0 0.0
    %103 = vmatpush1.msra.mxu0 0.0
    %104 = vmatprep.subr.mxu0 0.0
    %105 = vmatpush1.msra.mxu0 0.0
    %106 = vmatprep.subr.mxu0 0.0
    %107 = vmatpush1.msra.mxu0 0.0
    %108 = vmatprep.subr.mxu0 0.0
    %109 = vmatpush1.msra.mxu0 0.0
    %110 = vmatprep.subr.mxu0 0.0
    %111 = vmatpush1.msra.mxu0 0.0
    %112 = vmatprep.subr.mxu0 0.0
    %113 = vmatpush1.msra.mxu0 0.0
    %114 = vmatprep.subr.mxu0 0.0
    %115 = vmatpush1.msra.mxu0 0.0
    %116 = vmatprep.subr.mxu0 0.0
    %117 = vmatpush1.msra.mxu0 0.0
    %118 = vmatprep.subr.mxu0 0.0
    %119 = vmatpush1.msra.mxu0 0.0
    %120 = vmatprep.subr.mxu0 0.0
    %121 = vmatpush1.msra.mxu0 0.0
    %122 = vmatprep.subr.mxu0 0.0
    %123 = vmatpush1.msra.mxu0 0.0
    %124 = vmatprep.subr.mxu0 0.0
    %125 = vmatpush1.msra.mxu0 0.0
    %126 = vmatprep.subr.mxu0 0.0
    %127 = vmatpush1.msra.mxu0 0.0
    %128 = vmatprep.subr.mxu0 0.0
    %129 = vmatpush1.msra.mxu0 0.0
    %130 = vmatprep.subr.mxu0 0.0
    %131 = vmatpush1.msra.mxu0 0.0
    %132 = vmatprep.subr.mxu0 0.0
    %133 = vmatpush1.msra.mxu0 0.0
    %134 = vmatprep.subr.mxu0 0.0
    %135 = vmatpush1.msra.mxu0 0.0
    %136 = vmatprep.subr.mxu0 0.0
    %137 = vmatpush1.msra.mxu0 0.0
    %138 = vmatprep.subr.mxu0 0.0
    %139 = vmatpush1.msra.mxu0 0.0
    %140 = vmatprep.subr.mxu0 0.0
    %141 = vmatpush1.msra.mxu0 0.0
    %142 = vmatprep.mubr.f32.mxu0 0.0
    %143 = vmatmul.mubr.f32.gmra.mrb[0].mxu0 %v73
    %v144 = vpop.f32.mrb[0].mxu0
    %v145 = vadd.f32 0.0, %v144
    %v146 = vpop.f32.mrb[0].mxu0
    %147 = vmatprep.mubr.f32.mxu0 0.0
    %148 = vmatmul.mubr.f32.gmra.mrb[0].mxu0 %v76
    %v149 = vpop.f32.mrb[0].mxu0
    %v150 = vadd.f32 0.0, %v149
    %v151 = vpop.f32.mrb[0].mxu0
    %152 = vdwg.mxu0
    %155 = vrot.lane.b32.xlu0 %v145, 96
    %v156 = vpop.permute.xlu0 %155
    %157 = vrot.lane.b32.xlu0 %v150, 96
    %v158 = vpop.permute.xlu0 %157
    %vm159 = vcmask 64512
    %v160 = vsel %vm159, %v145, 0
    %v162 = vsel %vm159, %v150, 0
    %v164 = vsel %vm159, %v156, 0
    %v166 = vsel %vm159, %v158, 0
    %168 = vmatprep.subr.mxu0 0.0
    %169 = vmatpush1.xpose.msra.mxu0 %v164
    %170 = vmatprep.subr.mxu0 0.0
    %171 = vmatpush1.xpose.msra.mxu0 %v166
    %172 = vmatprep.subr.mxu0 0.0
    %173 = vmatpush1.xpose.msra.mxu0 0.0
    %174 = vmatprep.subr.mxu0 0.0
    %175 = vmatpush1.xpose.msra.mxu0 0.0
    %176 = vmatprep.subr.mxu0 0.0
    %177 = vmatpush1.xpose.msra.mxu0 0.0
    %178 = vmatprep.subr.mxu0 0.0
    %179 = vmatpush1.xpose.msra.mxu0 0.0
    %180 = vmatprep.subr.mxu0 0.0
    %181 = vmatpush1.xpose.msra.mxu0 0.0
    %182 = vmatprep.subr.mxu0 0.0
    %183 = vmatpush1.xpose.msra.mxu0 0.0
    %184 = vmatprep.subr.mxu0 0.0
    %185 = vmatpush1.xpose.msra.mxu0 0.0
    %186 = vmatprep.subr.mxu0 0.0
    %187 = vmatpush1.xpose.msra.mxu0 0.0
    %188 = vmatprep.subr.mxu0 0.0
    %189 = vmatpush1.xpose.msra.mxu0 0.0
    %190 = vmatprep.subr.mxu0 0.0
    %191 = vmatpush1.xpose.msra.mxu0 0.0
    %192 = vmatprep.subr.mxu0 0.0
    %193 = vmatpush1.xpose.msra.mxu0 0.0
    %194 = vmatprep.subr.mxu0 0.0
    %195 = vmatpush1.xpose.msra.mxu0 0.0
    %196 = vmatprep.subr.mxu0 0.0
    %197 = vmatpush1.xpose.msra.mxu0 0.0
    %198 = vmatprep.subr.mxu0 0.0
    %199 = vmatpush1.xpose.msra.mxu0 0.0
    %200 = vmatprep.subr.mxu0 0.0
    %201 = vmatpush1.xpose.msra.mxu0 0.0
    %202 = vmatprep.subr.mxu0 0.0
    %203 = vmatpush1.xpose.msra.mxu0 0.0
    %204 = vmatprep.subr.mxu0 0.0
    %205 = vmatpush1.xpose.msra.mxu0 0.0
    %206 = vmatprep.subr.mxu0 0.0
    %207 = vmatpush1.xpose.msra.mxu0 0.0
    %208 = vmatprep.subr.mxu0 0.0
    %209 = vmatpush1.xpose.msra.mxu0 0.0
    %210 = vmatprep.subr.mxu0 0.0
    %211 = vmatpush1.xpose.msra.mxu0 0.0
    %212 = vmatprep.subr.mxu0 0.0
    %213 = vmatpush1.xpose.msra.mxu0 0.0
    %214 = vmatprep.subr.mxu0 0.0
    %215 = vmatpush1.xpose.msra.mxu0 0.0
    %216 = vmatprep.subr.mxu0 0.0
    %217 = vmatpush1.xpose.msra.mxu0 0.0
    %218 = vmatprep.subr.mxu0 0.0
    %219 = vmatpush1.xpose.msra.mxu0 0.0
    %220 = vmatprep.subr.mxu0 0.0
    %221 = vmatpush1.xpose.msra.mxu0 0.0
    %222 = vmatprep.subr.mxu0 0.0
    %223 = vmatpush1.xpose.msra.mxu0 0.0
    %224 = vmatprep.subr.mxu0 0.0
    %225 = vmatpush1.xpose.msra.mxu0 0.0
    %226 = vmatprep.subr.mxu0 0.0
    %227 = vmatpush1.xpose.msra.mxu0 0.0
    %228 = vmatprep.subr.mxu0 0.0
    %229 = vmatpush1.xpose.msra.mxu0 0.0
    %230 = vmatprep.subr.mxu0 0.0
    %231 = vmatpush1.xpose.msra.mxu0 0.0
    %232 = vmatprep.mubr.f32.mxu0 0.0
    %233 = vmatmul.mubr.f32.gmra.mrb[0].mxu0 %v160
    %v234 = vpop.f32.mrb[0].mxu0
    %v235 = vadd.f32 %v26, %v234
    %v236 = vpop.f32.mrb[0].mxu0
    %237 = vmatprep.mubr.f32.mxu0 0.0
    %238 = vmatmul.mubr.f32.gmra.mrb[0].mxu0 %v162
    %v239 = vpop.f32.mrb[0].mxu0
    %v240 = vadd.f32 %v27, %v239
    %v241 = vpop.f32.mrb[0].mxu0
    %242 = vdwg.mxu0
    %vm243 = vcmask 130048
    %v244 = vsel %vm243, %v235, -inf
    %245 = vmax.xlane.f32.xlu0 %v244
    %v246 = vpop.xlane.xlu0 %245
    %v247 = vsel %vm243, %v240, -inf
    %248 = vmax.xlane.f32.xlu0 %v247
    %v249 = vpop.xlane.xlu0 %248
    %v250 = vsub.f32 %v235, %v246
    %v251 = vsub.f32 %v240, %v249
    %v252 = vmul.f32 %v250, 1.442695
    %v253 = vpow.pop %v252
    %v254 = vmul.f32 %v251, 1.442695
    %v255 = vpow.pop %v254
    %v256 = vsel %vm243, %v253, 0.0
    %257 = vadd.xlane.f32.xlu0 %v256
    %v258 = vpop.xlane.xlu0 %257
    %v259 = vsel %vm243, %v255, 0.0
    %260 = vadd.xlane.f32.xlu0 %v259
    %v261 = vpop.xlane.xlu0 %260
    %v262 = vrcp.pop %v258
    %v263 = vmul.f32 %v253, %v262
    %v264 = vrcp.pop %v261
    %v265 = vmul.f32 %v255, %v264
    %v266 = vld [vmem:[%s1 + $0x6] sm:$0x1]
    %v267 = vlaneseq
    %v268 = vshrl.u32 %v267, 7
    %v269 = vsub.s32 0, %v268
    %v270 = vrot.slane %v266, %v269
    %272 = vrot.lane.b32.xlu0 %v270, 64
    %v273 = vpop.permute.xlu0 %272
    %v275 = vmul.f32 %v145, %v273
    %v276 = vmul.f32 %v150, %v273
    %277 = vrot.lane.b32.xlu0 %v145, 120
    %v278 = vpop.permute.xlu0 %277
    %279 = vrot.lane.b32.xlu0 %v150, 120
    %v280 = vpop.permute.xlu0 %279
    %281 = vrot.lane.b32.xlu0 %v145, 88
    %v282 = vpop.permute.xlu0 %281
    %283 = vrot.lane.b32.xlu0 %v150, 88
    %v284 = vpop.permute.xlu0 %283
    %v285 = vsel %vm159, %v278, 0
    %v287 = vsel %vm159, %v280, 0
    %v289 = vsel %vm159, %v282, 0
    %v291 = vsel %vm159, %v284, 0
    %293 = vmatprep.subr.mxu0 0.0
    %294 = vmatpush1.xpose.msra.mxu0 %v289
    %295 = vmatprep.subr.mxu0 0.0
    %296 = vmatpush1.xpose.msra.mxu0 %v291
    %297 = vmatprep.subr.mxu0 0.0
    %298 = vmatpush1.xpose.msra.mxu0 0.0
    %299 = vmatprep.subr.mxu0 0.0
    %300 = vmatpush1.xpose.msra.mxu0 0.0
    %301 = vmatprep.subr.mxu0 0.0
    %302 = vmatpush1.xpose.msra.mxu0 0.0
    %303 = vmatprep.subr.mxu0 0.0
    %304 = vmatpush1.xpose.msra.mxu0 0.0
    %305 = vmatprep.subr.mxu0 0.0
    %306 = vmatpush1.xpose.msra.mxu0 0.0
    %307 = vmatprep.subr.mxu0 0.0
    %308 = vmatpush1.xpose.msra.mxu0 0.0
    %309 = vmatprep.subr.mxu0 0.0
    %310 = vmatpush1.xpose.msra.mxu0 0.0
    %311 = vmatprep.subr.mxu0 0.0
    %312 = vmatpush1.xpose.msra.mxu0 0.0
    %313 = vmatprep.subr.mxu0 0.0
    %314 = vmatpush1.xpose.msra.mxu0 0.0
    %315 = vmatprep.subr.mxu0 0.0
    %316 = vmatpush1.xpose.msra.mxu0 0.0
    %317 = vmatprep.subr.mxu0 0.0
    %318 = vmatpush1.xpose.msra.mxu0 0.0
    %319 = vmatprep.subr.mxu0 0.0
    %320 = vmatpush1.xpose.msra.mxu0 0.0
    %321 = vmatprep.subr.mxu0 0.0
    %322 = vmatpush1.xpose.msra.mxu0 0.0
    %323 = vmatprep.subr.mxu0 0.0
    %324 = vmatpush1.xpose.msra.mxu0 0.0
    %325 = vmatprep.subr.mxu0 0.0
    %326 = vmatpush1.xpose.msra.mxu0 0.0
    %327 = vmatprep.subr.mxu0 0.0
    %328 = vmatpush1.xpose.msra.mxu0 0.0
    %329 = vmatprep.subr.mxu0 0.0
    %330 = vmatpush1.xpose.msra.mxu0 0.0
    %331 = vmatprep.subr.mxu0 0.0
    %332 = vmatpush1.xpose.msra.mxu0 0.0
    %333 = vmatprep.subr.mxu0 0.0
    %334 = vmatpush1.xpose.msra.mxu0 0.0
    %335 = vmatprep.subr.mxu0 0.0
    %336 = vmatpush1.xpose.msra.mxu0 0.0
    %337 = vmatprep.subr.mxu0 0.0
    %338 = vmatpush1.xpose.msra.mxu0 0.0
    %339 = vmatprep.subr.mxu0 0.0
    %340 = vmatpush1.xpose.msra.mxu0 0.0
    %341 = vmatprep.subr.mxu0 0.0
    %342 = vmatpush1.xpose.msra.mxu0 0.0
    %343 = vmatprep.subr.mxu0 0.0
    %344 = vmatpush1.xpose.msra.mxu0 0.0
    %345 = vmatprep.subr.mxu0 0.0
    %346 = vmatpush1.xpose.msra.mxu0 0.0
    %347 = vmatprep.subr.mxu0 0.0
    %348 = vmatpush1.xpose.msra.mxu0 0.0
    %349 = vmatprep.subr.mxu0 0.0
    %350 = vmatpush1.xpose.msra.mxu0 0.0
    %351 = vmatprep.subr.mxu0 0.0
    %352 = vmatpush1.xpose.msra.mxu0 0.0
    %353 = vmatprep.subr.mxu0 0.0
    %354 = vmatpush1.xpose.msra.mxu0 0.0
    %355 = vmatprep.subr.mxu0 0.0
    %356 = vmatpush1.xpose.msra.mxu0 0.0
    %357 = vmatprep.mubr.f32.mxu0 0.0
    %358 = vmatmul.mubr.f32.gmra.mrb[0].mxu0 %v285
    %v359 = vpop.f32.mrb[0].mxu0
    %v360 = vadd.f32 %v26, %v359
    %v361 = vpop.f32.mrb[0].mxu0
    %362 = vmatprep.mubr.f32.mxu0 0.0
    %363 = vmatmul.mubr.f32.gmra.mrb[0].mxu0 %v287
    %v364 = vpop.f32.mrb[0].mxu0
    %v365 = vadd.f32 %v27, %v364
    %v366 = vpop.f32.mrb[0].mxu0
    %367 = vdwg.mxu0
    %v368 = vsel %vm243, %v360, -inf
    %369 = vmax.xlane.f32.xlu0 %v368
    %v370 = vpop.xlane.xlu0 %369
    %v371 = vsel %vm243, %v365, -inf
    %372 = vmax.xlane.f32.xlu0 %v371
    %v373 = vpop.xlane.xlu0 %372
    %v374 = vsub.f32 %v360, %v370
    %v375 = vsub.f32 %v365, %v373
    %v376 = vmul.f32 %v374, 1.442695
    %v377 = vpow.pop %v376
    %v378 = vmul.f32 %v375, 1.442695
    %v379 = vpow.pop %v378
    %v380 = vsel %vm243, %v377, 0.0
    %381 = vadd.xlane.f32.xlu0 %v380
    %v382 = vpop.xlane.xlu0 %381
    %v383 = vsel %vm243, %v379, 0.0
    %384 = vadd.xlane.f32.xlu0 %v383
    %v385 = vpop.xlane.xlu0 %384
    %v386 = vrcp.pop %v382
    %v387 = vmul.f32 %v377, %v386
    %v388 = vrcp.pop %v385
    %v389 = vmul.f32 %v379, %v388
    %v390 = vld [vmem:[%s1 + $0x7] sm:$0x1]
    %v391 = vlaneseq
    %v392 = vshrl.u32 %v391, 7
    %v393 = vsub.s32 0, %v392
    %v394 = vrot.slane %v390, %v393
    %396 = vrot.lane.b32.xlu0 %v394, 64
    %v397 = vpop.permute.xlu0 %396
    %v399 = vmul.f32 %v145, %v397
    %v400 = vmul.f32 %v150, %v397
    %403 = vrot.lane.b32.xlu0 %v399, 64
    %v404 = vpop.permute.xlu0 %403
    %405 = vrot.lane.b32.xlu0 %v400, 64
    %v406 = vpop.permute.xlu0 %405
    %v410 = vsel %vm243, %v387, 0
    %v413 = vsel %vm243, %v389, 0
    %415 = vmatprep.subr.mxu0 0.0
    %416 = vmatpush1.msra.mxu0 %v404
    %417 = vmatprep.subr.mxu0 0.0
    %418 = vmatpush1.msra.mxu0 %v406
    %419 = vmatprep.subr.mxu0 0.0
    %420 = vmatpush1.msra.mxu0 0.0
    %421 = vmatprep.subr.mxu0 0.0
    %422 = vmatpush1.msra.mxu0 0.0
    %423 = vmatprep.subr.mxu0 0.0
    %424 = vmatpush1.msra.mxu0 0.0
    %425 = vmatprep.subr.mxu0 0.0
    %426 = vmatpush1.msra.mxu0 0.0
    %427 = vmatprep.subr.mxu0 0.0
    %428 = vmatpush1.msra.mxu0 0.0
    %429 = vmatprep.subr.mxu0 0.0
    %430 = vmatpush1.msra.mxu0 0.0
    %431 = vmatprep.subr.mxu0 0.0
    %432 = vmatpush1.msra.mxu0 0.0
    %433 = vmatprep.subr.mxu0 0.0
    %434 = vmatpush1.msra.mxu0 0.0
    %435 = vmatprep.subr.mxu0 0.0
    %436 = vmatpush1.msra.mxu0 0.0
    %437 = vmatprep.subr.mxu0 0.0
    %438 = vmatpush1.msra.mxu0 0.0
    %439 = vmatprep.subr.mxu0 0.0
    %440 = vmatpush1.msra.mxu0 0.0
    %441 = vmatprep.subr.mxu0 0.0
    %442 = vmatpush1.msra.mxu0 0.0
    %443 = vmatprep.subr.mxu0 0.0
    %444 = vmatpush1.msra.mxu0 0.0
    %445 = vmatprep.subr.mxu0 0.0
    %446 = vmatpush1.msra.mxu0 0.0
    %447 = vmatprep.subr.mxu0 0.0
    %448 = vmatpush1.msra.mxu0 0.0
    %449 = vmatprep.subr.mxu0 0.0
    %450 = vmatpush1.msra.mxu0 0.0
    %451 = vmatprep.subr.mxu0 0.0
    %452 = vmatpush1.msra.mxu0 0.0
    %453 = vmatprep.subr.mxu0 0.0
    %454 = vmatpush1.msra.mxu0 0.0
    %455 = vmatprep.subr.mxu0 0.0
    %456 = vmatpush1.msra.mxu0 0.0
    %457 = vmatprep.subr.mxu0 0.0
    %458 = vmatpush1.msra.mxu0 0.0
    %459 = vmatprep.subr.mxu0 0.0
    %460 = vmatpush1.msra.mxu0 0.0
    %461 = vmatprep.subr.mxu0 0.0
    %462 = vmatpush1.msra.mxu0 0.0
    %463 = vmatprep.subr.mxu0 0.0
    %464 = vmatpush1.msra.mxu0 0.0
    %465 = vmatprep.subr.mxu0 0.0
    %466 = vmatpush1.msra.mxu0 0.0
    %467 = vmatprep.subr.mxu0 0.0
    %468 = vmatpush1.msra.mxu0 0.0
    %469 = vmatprep.subr.mxu0 0.0
    %470 = vmatpush1.msra.mxu0 0.0
    %471 = vmatprep.subr.mxu0 0.0
    %472 = vmatpush1.msra.mxu0 0.0
    %473 = vmatprep.subr.mxu0 0.0
    %474 = vmatpush1.msra.mxu0 0.0
    %475 = vmatprep.subr.mxu0 0.0
    %476 = vmatpush1.msra.mxu0 0.0
    %477 = vmatprep.subr.mxu0 0.0
    %478 = vmatpush1.msra.mxu0 0.0
    %479 = vmatprep.mubr.f32.mxu0 0.0
    %480 = vmatmul.mubr.f32.gmra.mrb[0].mxu0 %v410
    %v481 = vpop.f32.mrb[0].mxu0
    %v482 = vadd.f32 0.0, %v481
    %v483 = vpop.f32.mrb[0].mxu0
    %484 = vmatprep.mubr.f32.mxu0 0.0
    %485 = vmatmul.mubr.f32.gmra.mrb[0].mxu0 %v413
    %v486 = vpop.f32.mrb[0].mxu0
    %v487 = vadd.f32 0.0, %v486
    %v488 = vpop.f32.mrb[0].mxu0
    %489 = vdwg.mxu0
    %492 = vrot.lane.b32.xlu0 %v275, 64
    %v493 = vpop.permute.xlu0 %492
    %494 = vrot.lane.b32.xlu0 %v276, 64
    %v495 = vpop.permute.xlu0 %494
    %v499 = vsel %vm243, %v263, 0
    %v502 = vsel %vm243, %v265, 0
    %504 = vmatprep.subr.mxu0 0.0
    %505 = vmatpush1.msra.mxu0 %v493
    %506 = vmatprep.subr.mxu0 0.0
    %507 = vmatpush1.msra.mxu0 %v495
    %508 = vmatprep.subr.mxu0 0.0
    %509 = vmatpush1.msra.mxu0 0.0
    %510 = vmatprep.subr.mxu0 0.0
    %511 = vmatpush1.msra.mxu0 0.0
    %512 = vmatprep.subr.mxu0 0.0
    %513 = vmatpush1.msra.mxu0 0.0
    %514 = vmatprep.subr.mxu0 0.0
    %515 = vmatpush1.msra.mxu0 0.0
    %516 = vmatprep.subr.mxu0 0.0
    %517 = vmatpush1.msra.mxu0 0.0
    %518 = vmatprep.subr.mxu0 0.0
    %519 = vmatpush1.msra.mxu0 0.0
    %520 = vmatprep.subr.mxu0 0.0
    %521 = vmatpush1.msra.mxu0 0.0
    %522 = vmatprep.subr.mxu0 0.0
    %523 = vmatpush1.msra.mxu0 0.0
    %524 = vmatprep.subr.mxu0 0.0
    %525 = vmatpush1.msra.mxu0 0.0
    %526 = vmatprep.subr.mxu0 0.0
    %527 = vmatpush1.msra.mxu0 0.0
    %528 = vmatprep.subr.mxu0 0.0
    %529 = vmatpush1.msra.mxu0 0.0
    %530 = vmatprep.subr.mxu0 0.0
    %531 = vmatpush1.msra.mxu0 0.0
    %532 = vmatprep.subr.mxu0 0.0
    %533 = vmatpush1.msra.mxu0 0.0
    %534 = vmatprep.subr.mxu0 0.0
    %535 = vmatpush1.msra.mxu0 0.0
    %536 = vmatprep.subr.mxu0 0.0
    %537 = vmatpush1.msra.mxu0 0.0
    %538 = vmatprep.subr.mxu0 0.0
    %539 = vmatpush1.msra.mxu0 0.0
    %540 = vmatprep.subr.mxu0 0.0
    %541 = vmatpush1.msra.mxu0 0.0
    %542 = vmatprep.subr.mxu0 0.0
    %543 = vmatpush1.msra.mxu0 0.0
    %544 = vmatprep.subr.mxu0 0.0
    %545 = vmatpush1.msra.mxu0 0.0
    %546 = vmatprep.subr.mxu0 0.0
    %547 = vmatpush1.msra.mxu0 0.0
    %548 = vmatprep.subr.mxu0 0.0
    %549 = vmatpush1.msra.mxu0 0.0
    %550 = vmatprep.subr.mxu0 0.0
    %551 = vmatpush1.msra.mxu0 0.0
    %552 = vmatprep.subr.mxu0 0.0
    %553 = vmatpush1.msra.mxu0 0.0
    %554 = vmatprep.subr.mxu0 0.0
    %555 = vmatpush1.msra.mxu0 0.0
    %556 = vmatprep.subr.mxu0 0.0
    %557 = vmatpush1.msra.mxu0 0.0
    %558 = vmatprep.subr.mxu0 0.0
    %559 = vmatpush1.msra.mxu0 0.0
    %560 = vmatprep.subr.mxu0 0.0
    %561 = vmatpush1.msra.mxu0 0.0
    %562 = vmatprep.subr.mxu0 0.0
    %563 = vmatpush1.msra.mxu0 0.0
    %564 = vmatprep.subr.mxu0 0.0
    %565 = vmatpush1.msra.mxu0 0.0
    %566 = vmatprep.subr.mxu0 0.0
    %567 = vmatpush1.msra.mxu0 0.0
    %568 = vmatprep.mubr.f32.mxu0 0.0
    %569 = vmatmul.mubr.f32.gmra.mrb[0].mxu0 %v499
    %v570 = vpop.f32.mrb[0].mxu0
    %v571 = vadd.f32 %v482, %v570
    %v572 = vpop.f32.mrb[0].mxu0
    %573 = vmatprep.mubr.f32.mxu0 0.0
    %574 = vmatmul.mubr.f32.gmra.mrb[0].mxu0 %v502
    %v575 = vpop.f32.mrb[0].mxu0
    %v576 = vadd.f32 %v487, %v575
    %v577 = vpop.f32.mrb[0].mxu0
    %578 = vdwg.mxu0
    %579 = vrot.lane.b32.xlu0 %v145, 112
    %v580 = vpop.permute.xlu0 %579
    %581 = vrot.lane.b32.xlu0 %v150, 112
    %v582 = vpop.permute.xlu0 %581
    %583 = vrot.lane.b32.xlu0 %v145, 80
    %v584 = vpop.permute.xlu0 %583
    %585 = vrot.lane.b32.xlu0 %v150, 80
    %v586 = vpop.permute.xlu0 %585
    %v587 = vsel %vm159, %v580, 0
    %v589 = vsel %vm159, %v582, 0
    %v591 = vsel %vm159, %v584, 0
    %v593 = vsel %vm159, %v586, 0
    %595 = vmatprep.subr.mxu0 0.0
    %596 = vmatpush1.xpose.msra.mxu0 %v591
    %597 = vmatprep.subr.mxu0 0.0
    %598 = vmatpush1.xpose.msra.mxu0 %v593
    %599 = vmatprep.subr.mxu0 0.0
    %600 = vmatpush1.xpose.msra.mxu0 0.0
    %601 = vmatprep.subr.mxu0 0.0
    %602 = vmatpush1.xpose.msra.mxu0 0.0
    %603 = vmatprep.subr.mxu0 0.0
    %604 = vmatpush1.xpose.msra.mxu0 0.0
    %605 = vmatprep.subr.mxu0 0.0
    %606 = vmatpush1.xpose.msra.mxu0 0.0
    %607 = vmatprep.subr.mxu0 0.0
    %608 = vmatpush1.xpose.msra.mxu0 0.0
    %609 = vmatprep.subr.mxu0 0.0
    %610 = vmatpush1.xpose.msra.mxu0 0.0
    %611 = vmatprep.subr.mxu0 0.0
    %612 = vmatpush1.xpose.msra.mxu0 0.0
    %613 = vmatprep.subr.mxu0 0.0
    %614 = vmatpush1.xpose.msra.mxu0 0.0
    %615 = vmatprep.subr.mxu0 0.0
    %616 = vmatpush1.xpose.msra.mxu0 0.0
    %617 = vmatprep.subr.mxu0 0.0
    %618 = vmatpush1.xpose.msra.mxu0 0.0
    %619 = vmatprep.subr.mxu0 0.0
    %620 = vmatpush1.xpose.msra.mxu0 0.0
    %621 = vmatprep.subr.mxu0 0.0
    %622 = vmatpush1.xpose.msra.mxu0 0.0
    %623 = vmatprep.subr.mxu0 0.0
    %624 = vmatpush1.xpose.msra.mxu0 0.0
    %625 = vmatprep.subr.mxu0 0.0
    %626 = vmatpush1.xpose.msra.mxu0 0.0
    %627 = vmatprep.subr.mxu0 0.0
    %628 = vmatpush1.xpose.msra.mxu0 0.0
    %629 = vmatprep.subr.mxu0 0.0
    %630 = vmatpush1.xpose.msra.mxu0 0.0
    %631 = vmatprep.subr.mxu0 0.0
    %632 = vmatpush1.xpose.msra.mxu0 0.0
    %633 = vmatprep.subr.mxu0 0.0
    %634 = vmatpush1.xpose.msra.mxu0 0.0
    %635 = vmatprep.subr.mxu0 0.0
    %636 = vmatpush1.xpose.msra.mxu0 0.0
    %637 = vmatprep.subr.mxu0 0.0
    %638 = vmatpush1.xpose.msra.mxu0 0.0
    %639 = vmatprep.subr.mxu0 0.0
    %640 = vmatpush1.xpose.msra.mxu0 0.0
    %641 = vmatprep.subr.mxu0 0.0
    %642 = vmatpush1.xpose.msra.mxu0 0.0
    %643 = vmatprep.subr.mxu0 0.0
    %644 = vmatpush1.xpose.msra.mxu0 0.0
    %645 = vmatprep.subr.mxu0 0.0
    %646 = vmatpush1.xpose.msra.mxu0 0.0
    %647 = vmatprep.subr.mxu0 0.0
    %648 = vmatpush1.xpose.msra.mxu0 0.0
    %649 = vmatprep.subr.mxu0 0.0
    %650 = vmatpush1.xpose.msra.mxu0 0.0
    %651 = vmatprep.subr.mxu0 0.0
    %652 = vmatpush1.xpose.msra.mxu0 0.0
    %653 = vmatprep.subr.mxu0 0.0
    %654 = vmatpush1.xpose.msra.mxu0 0.0
    %655 = vmatprep.subr.mxu0 0.0
    %656 = vmatpush1.xpose.msra.mxu0 0.0
    %657 = vmatprep.subr.mxu0 0.0
    %658 = vmatpush1.xpose.msra.mxu0 0.0
    %659 = vmatprep.mubr.f32.mxu0 0.0
    %660 = vmatmul.mubr.f32.gmra.mrb[0].mxu0 %v587
    %v661 = vpop.f32.mrb[0].mxu0
    %v662 = vadd.f32 %v26, %v661
    %v663 = vpop.f32.mrb[0].mxu0
    %664 = vmatprep.mubr.f32.mxu0 0.0
    %665 = vmatmul.mubr.f32.gmra.mrb[0].mxu0 %v589
    %v666 = vpop.f32.mrb[0].mxu0
    %v667 = vadd.f32 %v27, %v666
    %v668 = vpop.f32.mrb[0].mxu0
    %669 = vdwg.mxu0
    %v670 = vsel %vm243, %v662, -inf
    %671 = vmax.xlane.f32.xlu0 %v670
    %v672 = vpop.xlane.xlu0 %671
    %v673 = vsel %vm243, %v667, -inf
    %674 = vmax.xlane.f32.xlu0 %v673
    %v675 = vpop.xlane.xlu0 %674
    %v676 = vsub.f32 %v662, %v672
    %v677 = vsub.f32 %v667, %v675
    %v678 = vmul.f32 %v676, 1.442695
    %v679 = vpow.pop %v678
    %v680 = vmul.f32 %v677, 1.442695
    %v681 = vpow.pop %v680
    %v682 = vsel %vm243, %v679, 0.0
    %683 = vadd.xlane.f32.xlu0 %v682
    %v684 = vpop.xlane.xlu0 %683
    %v685 = vsel %vm243, %v681, 0.0
    %686 = vadd.xlane.f32.xlu0 %v685
    %v687 = vpop.xlane.xlu0 %686
    %v688 = vrcp.pop %v684
    %v689 = vmul.f32 %v679, %v688
    %v690 = vrcp.pop %v687
    %v691 = vmul.f32 %v681, %v690
    %v692 = vld [vmem:[%s1 + $0x8] sm:$0x1]
    %v693 = vlaneseq
    %v694 = vshrl.u32 %v693, 7
    %v695 = vsub.s32 0, %v694
    %v696 = vrot.slane %v692, %v695
    %698 = vrot.lane.b32.xlu0 %v696, 64
    %v699 = vpop.permute.xlu0 %698
    %v701 = vmul.f32 %v145, %v699
    %v702 = vmul.f32 %v150, %v699
    %705 = vrot.lane.b32.xlu0 %v701, 64
    %v706 = vpop.permute.xlu0 %705
    %707 = vrot.lane.b32.xlu0 %v702, 64
    %v708 = vpop.permute.xlu0 %707
    %v712 = vsel %vm243, %v689, 0
    %v715 = vsel %vm243, %v691, 0
    %717 = vmatprep.subr.mxu0 0.0
    %718 = vmatpush1.msra.mxu0 %v706
    %719 = vmatprep.subr.mxu0 0.0
    %720 = vmatpush1.msra.mxu0 %v708
    %721 = vmatprep.subr.mxu0 0.0
    %722 = vmatpush1.msra.mxu0 0.0
    %723 = vmatprep.subr.mxu0 0.0
    %724 = vmatpush1.msra.mxu0 0.0
    %725 = vmatprep.subr.mxu0 0.0
    %726 = vmatpush1.msra.mxu0 0.0
    %727 = vmatprep.subr.mxu0 0.0
    %728 = vmatpush1.msra.mxu0 0.0
    %729 = vmatprep.subr.mxu0 0.0
    %730 = vmatpush1.msra.mxu0 0.0
    %731 = vmatprep.subr.mxu0 0.0
    %732 = vmatpush1.msra.mxu0 0.0
    %733 = vmatprep.subr.mxu0 0.0
    %734 = vmatpush1.msra.mxu0 0.0
    %735 = vmatprep.subr.mxu0 0.0
    %736 = vmatpush1.msra.mxu0 0.0
    %737 = vmatprep.subr.mxu0 0.0
    %738 = vmatpush1.msra.mxu0 0.0
    %739 = vmatprep.subr.mxu0 0.0
    %740 = vmatpush1.msra.mxu0 0.0
    %741 = vmatprep.subr.mxu0 0.0
    %742 = vmatpush1.msra.mxu0 0.0
    %743 = vmatprep.subr.mxu0 0.0
    %744 = vmatpush1.msra.mxu0 0.0
    %745 = vmatprep.subr.mxu0 0.0
    %746 = vmatpush1.msra.mxu0 0.0
    %747 = vmatprep.subr.mxu0 0.0
    %748 = vmatpush1.msra.mxu0 0.0
    %749 = vmatprep.subr.mxu0 0.0
    %750 = vmatpush1.msra.mxu0 0.0
    %751 = vmatprep.subr.mxu0 0.0
    %752 = vmatpush1.msra.mxu0 0.0
    %753 = vmatprep.subr.mxu0 0.0
    %754 = vmatpush1.msra.mxu0 0.0
    %755 = vmatprep.subr.mxu0 0.0
    %756 = vmatpush1.msra.mxu0 0.0
    %757 = vmatprep.subr.mxu0 0.0
    %758 = vmatpush1.msra.mxu0 0.0
    %759 = vmatprep.subr.mxu0 0.0
    %760 = vmatpush1.msra.mxu0 0.0
    %761 = vmatprep.subr.mxu0 0.0
    %762 = vmatpush1.msra.mxu0 0.0
    %763 = vmatprep.subr.mxu0 0.0
    %764 = vmatpush1.msra.mxu0 0.0
    %765 = vmatprep.subr.mxu0 0.0
    %766 = vmatpush1.msra.mxu0 0.0
    %767 = vmatprep.subr.mxu0 0.0
    %768 = vmatpush1.msra.mxu0 0.0
    %769 = vmatprep.subr.mxu0 0.0
    %770 = vmatpush1.msra.mxu0 0.0
    %771 = vmatprep.subr.mxu0 0.0
    %772 = vmatpush1.msra.mxu0 0.0
    %773 = vmatprep.subr.mxu0 0.0
    %774 = vmatpush1.msra.mxu0 0.0
    %775 = vmatprep.subr.mxu0 0.0
    %776 = vmatpush1.msra.mxu0 0.0
    %777 = vmatprep.subr.mxu0 0.0
    %778 = vmatpush1.msra.mxu0 0.0
    %779 = vmatprep.subr.mxu0 0.0
    %780 = vmatpush1.msra.mxu0 0.0
    %781 = vmatprep.mubr.f32.mxu0 0.0
    %782 = vmatmul.mubr.f32.gmra.mrb[0].mxu0 %v712
    %v783 = vpop.f32.mrb[0].mxu0
    %v784 = vadd.f32 0.0, %v783
    %v785 = vpop.f32.mrb[0].mxu0
    %786 = vmatprep.mubr.f32.mxu0 0.0
    %787 = vmatmul.mubr.f32.gmra.mrb[0].mxu0 %v715
    %v788 = vpop.f32.mrb[0].mxu0
    %v789 = vadd.f32 0.0, %v788
    %v790 = vpop.f32.mrb[0].mxu0
    %791 = vdwg.mxu0
    %v792 = vadd.f32 %v571, %v784
    %v793 = vadd.f32 %v576, %v789
    %794 = vrot.lane.b32.xlu0 %v145, 104
    %v795 = vpop.permute.xlu0 %794
    %796 = vrot.lane.b32.xlu0 %v150, 104
    %v797 = vpop.permute.xlu0 %796
    %798 = vrot.lane.b32.xlu0 %v145, 72
    %v799 = vpop.permute.xlu0 %798
    %800 = vrot.lane.b32.xlu0 %v150, 72
    %v801 = vpop.permute.xlu0 %800
    %v802 = vsel %vm159, %v795, 0
    %v804 = vsel %vm159, %v797, 0
    %v806 = vsel %vm159, %v799, 0
    %v808 = vsel %vm159, %v801, 0
    %810 = vmatprep.subr.mxu0 0.0
    %811 = vmatpush1.xpose.msra.mxu0 %v806
    %812 = vmatprep.subr.mxu0 0.0
    %813 = vmatpush1.xpose.msra.mxu0 %v808
    %814 = vmatprep.subr.mxu0 0.0
    %815 = vmatpush1.xpose.msra.mxu0 0.0
    %816 = vmatprep.subr.mxu0 0.0
    %817 = vmatpush1.xpose.msra.mxu0 0.0
    %818 = vmatprep.subr.mxu0 0.0
    %819 = vmatpush1.xpose.msra.mxu0 0.0
    %820 = vmatprep.subr.mxu0 0.0
    %821 = vmatpush1.xpose.msra.mxu0 0.0
    %822 = vmatprep.subr.mxu0 0.0
    %823 = vmatpush1.xpose.msra.mxu0 0.0
    %824 = vmatprep.subr.mxu0 0.0
    %825 = vmatpush1.xpose.msra.mxu0 0.0
    %826 = vmatprep.subr.mxu0 0.0
    %827 = vmatpush1.xpose.msra.mxu0 0.0
    %828 = vmatprep.subr.mxu0 0.0
    %829 = vmatpush1.xpose.msra.mxu0 0.0
    %830 = vmatprep.subr.mxu0 0.0
    %831 = vmatpush1.xpose.msra.mxu0 0.0
    %832 = vmatprep.subr.mxu0 0.0
    %833 = vmatpush1.xpose.msra.mxu0 0.0
    %834 = vmatprep.subr.mxu0 0.0
    %835 = vmatpush1.xpose.msra.mxu0 0.0
    %836 = vmatprep.subr.mxu0 0.0
    %837 = vmatpush1.xpose.msra.mxu0 0.0
    %838 = vmatprep.subr.mxu0 0.0
    %839 = vmatpush1.xpose.msra.mxu0 0.0
    %840 = vmatprep.subr.mxu0 0.0
    %841 = vmatpush1.xpose.msra.mxu0 0.0
    %842 = vmatprep.subr.mxu0 0.0
    %843 = vmatpush1.xpose.msra.mxu0 0.0
    %844 = vmatprep.subr.mxu0 0.0
    %845 = vmatpush1.xpose.msra.mxu0 0.0
    %846 = vmatprep.subr.mxu0 0.0
    %847 = vmatpush1.xpose.msra.mxu0 0.0
    %848 = vmatprep.subr.mxu0 0.0
    %849 = vmatpush1.xpose.msra.mxu0 0.0
    %850 = vmatprep.subr.mxu0 0.0
    %851 = vmatpush1.xpose.msra.mxu0 0.0
    %852 = vmatprep.subr.mxu0 0.0
    %853 = vmatpush1.xpose.msra.mxu0 0.0
    %854 = vmatprep.subr.mxu0 0.0
    %855 = vmatpush1.xpose.msra.mxu0 0.0
    %856 = vmatprep.subr.mxu0 0.0
    %857 = vmatpush1.xpose.msra.mxu0 0.0
    %858 = vmatprep.subr.mxu0 0.0
    %859 = vmatpush1.xpose.msra.mxu0 0.0
    %860 = vmatprep.subr.mxu0 0.0
    %861 = vmatpush1.xpose.msra.mxu0 0.0
    %862 = vmatprep.subr.mxu0 0.0
    %863 = vmatpush1.xpose.msra.mxu0 0.0
    %864 = vmatprep.subr.mxu0 0.0
    %865 = vmatpush1.xpose.msra.mxu0 0.0
    %866 = vmatprep.subr.mxu0 0.0
    %867 = vmatpush1.xpose.msra.mxu0 0.0
    %868 = vmatprep.subr.mxu0 0.0
    %869 = vmatpush1.xpose.msra.mxu0 0.0
    %870 = vmatprep.subr.mxu0 0.0
    %871 = vmatpush1.xpose.msra.mxu0 0.0
    %872 = vmatprep.subr.mxu0 0.0
    %873 = vmatpush1.xpose.msra.mxu0 0.0
    %874 = vmatprep.mubr.f32.mxu0 0.0
    %875 = vmatmul.mubr.f32.gmra.mrb[0].mxu0 %v802
    %v876 = vpop.f32.mrb[0].mxu0
    %v877 = vadd.f32 %v26, %v876
    %v878 = vpop.f32.mrb[0].mxu0
    %879 = vmatprep.mubr.f32.mxu0 0.0
    %880 = vmatmul.mubr.f32.gmra.mrb[0].mxu0 %v804
    %v881 = vpop.f32.mrb[0].mxu0
    %v882 = vadd.f32 %v27, %v881
    %v883 = vpop.f32.mrb[0].mxu0
    %884 = vdwg.mxu0
    %v885 = vsel %vm243, %v877, -inf
    %886 = vmax.xlane.f32.xlu0 %v885
    %v887 = vpop.xlane.xlu0 %886
    %v888 = vsel %vm243, %v882, -inf
    %889 = vmax.xlane.f32.xlu0 %v888
    %v890 = vpop.xlane.xlu0 %889
    %v891 = vsub.f32 %v877, %v887
    %v892 = vsub.f32 %v882, %v890
    %v893 = vmul.f32 %v891, 1.442695
    %v894 = vpow.pop %v893
    %v895 = vmul.f32 %v892, 1.442695
    %v896 = vpow.pop %v895
    %v897 = vsel %vm243, %v894, 0.0
    %898 = vadd.xlane.f32.xlu0 %v897
    %v899 = vpop.xlane.xlu0 %898
    %v900 = vsel %vm243, %v896, 0.0
    %901 = vadd.xlane.f32.xlu0 %v900
    %v902 = vpop.xlane.xlu0 %901
    %v903 = vrcp.pop %v899
    %v904 = vmul.f32 %v894, %v903
    %v905 = vrcp.pop %v902
    %v906 = vmul.f32 %v896, %v905
    %v907 = vld [vmem:[%s1 + $0x9] sm:$0x1]
    %v908 = vlaneseq
    %v909 = vshrl.u32 %v908, 7
    %v910 = vsub.s32 0, %v909
    %v911 = vrot.slane %v907, %v910
    %913 = vrot.lane.b32.xlu0 %v911, 64
    %v914 = vpop.permute.xlu0 %913
    %v916 = vmul.f32 %v145, %v914
    %v917 = vmul.f32 %v150, %v914
    %920 = vrot.lane.b32.xlu0 %v916, 64
    %v921 = vpop.permute.xlu0 %920
    %922 = vrot.lane.b32.xlu0 %v917, 64
    %v923 = vpop.permute.xlu0 %922
    %v927 = vsel %vm243, %v904, 0
    %v930 = vsel %vm243, %v906, 0
    %932 = vmatprep.subr.mxu0 0.0
    %933 = vmatpush1.msra.mxu0 %v921
    %934 = vmatprep.subr.mxu0 0.0
    %935 = vmatpush1.msra.mxu0 %v923
    %936 = vmatprep.subr.mxu0 0.0
    %937 = vmatpush1.msra.mxu0 0.0
    %938 = vmatprep.subr.mxu0 0.0
    %939 = vmatpush1.msra.mxu0 0.0
    %940 = vmatprep.subr.mxu0 0.0
    %941 = vmatpush1.msra.mxu0 0.0
    %942 = vmatprep.subr.mxu0 0.0
    %943 = vmatpush1.msra.mxu0 0.0
    %944 = vmatprep.subr.mxu0 0.0
    %945 = vmatpush1.msra.mxu0 0.0
    %946 = vmatprep.subr.mxu0 0.0
    %947 = vmatpush1.msra.mxu0 0.0
    %948 = vmatprep.subr.mxu0 0.0
    %949 = vmatpush1.msra.mxu0 0.0
    %950 = vmatprep.subr.mxu0 0.0
    %951 = vmatpush1.msra.mxu0 0.0
    %952 = vmatprep.subr.mxu0 0.0
    %953 = vmatpush1.msra.mxu0 0.0
    %954 = vmatprep.subr.mxu0 0.0
    %955 = vmatpush1.msra.mxu0 0.0
    %956 = vmatprep.subr.mxu0 0.0
    %957 = vmatpush1.msra.mxu0 0.0
    %958 = vmatprep.subr.mxu0 0.0
    %959 = vmatpush1.msra.mxu0 0.0
    %960 = vmatprep.subr.mxu0 0.0
    %961 = vmatpush1.msra.mxu0 0.0
    %962 = vmatprep.subr.mxu0 0.0
    %963 = vmatpush1.msra.mxu0 0.0
    %964 = vmatprep.subr.mxu0 0.0
    %965 = vmatpush1.msra.mxu0 0.0
    %966 = vmatprep.subr.mxu0 0.0
    %967 = vmatpush1.msra.mxu0 0.0
    %968 = vmatprep.subr.mxu0 0.0
    %969 = vmatpush1.msra.mxu0 0.0
    %970 = vmatprep.subr.mxu0 0.0
    %971 = vmatpush1.msra.mxu0 0.0
    %972 = vmatprep.subr.mxu0 0.0
    %973 = vmatpush1.msra.mxu0 0.0
    %974 = vmatprep.subr.mxu0 0.0
    %975 = vmatpush1.msra.mxu0 0.0
    %976 = vmatprep.subr.mxu0 0.0
    %977 = vmatpush1.msra.mxu0 0.0
    %978 = vmatprep.subr.mxu0 0.0
    %979 = vmatpush1.msra.mxu0 0.0
    %980 = vmatprep.subr.mxu0 0.0
    %981 = vmatpush1.msra.mxu0 0.0
    %982 = vmatprep.subr.mxu0 0.0
    %983 = vmatpush1.msra.mxu0 0.0
    %984 = vmatprep.subr.mxu0 0.0
    %985 = vmatpush1.msra.mxu0 0.0
    %986 = vmatprep.subr.mxu0 0.0
    %987 = vmatpush1.msra.mxu0 0.0
    %988 = vmatprep.subr.mxu0 0.0
    %989 = vmatpush1.msra.mxu0 0.0
    %990 = vmatprep.subr.mxu0 0.0
    %991 = vmatpush1.msra.mxu0 0.0
    %992 = vmatprep.subr.mxu0 0.0
    %993 = vmatpush1.msra.mxu0 0.0
    %994 = vmatprep.subr.mxu0 0.0
    %995 = vmatpush1.msra.mxu0 0.0
    %996 = vmatprep.mubr.f32.mxu0 0.0
    %997 = vmatmul.mubr.f32.gmra.mrb[0].mxu0 %v927
    %v998 = vpop.f32.mrb[0].mxu0
    %v999 = vadd.f32 0.0, %v998
    %v1000 = vpop.f32.mrb[0].mxu0
    %1001 = vmatprep.mubr.f32.mxu0 0.0
    %1002 = vmatmul.mubr.f32.gmra.mrb[0].mxu0 %v930
    %v1003 = vpop.f32.mrb[0].mxu0
    %v1004 = vadd.f32 0.0, %v1003
    %v1005 = vpop.f32.mrb[0].mxu0
    %1006 = vdwg.mxu0
    %v1007 = vadd.f32 %v792, %v999
    %v1008 = vadd.f32 %v793, %v1004
    %v1009 = vadd.f32 %v18, %v1007
    %v1010 = vadd.f32 %v19, %v1008
    %v1011 = vsel %vm28, %v1009, 0.0
    %1012 = vadd.xlane.f32.xlu0 %v1011
    %v1013 = vpop.xlane.xlu0 %1012
    %v1014 = vsel %vm28, %v1010, 0.0
    %1015 = vadd.xlane.f32.xlu0 %v1014
    %v1016 = vpop.xlane.xlu0 %1015
    %v1017 = vmul.f32 %v1013, %v35
    %v1018 = vmul.f32 %v1016, %v35
    %v1019 = vsub.f32 %v1009, %v1017
    %v1020 = vsub.f32 %v1010, %v1018
    %v1021 = vmul.f32 %v1019, %v1019
    %v1022 = vmul.f32 %v1020, %v1020
    %v1023 = vsel %vm28, %v1021, 0.0
    %1024 = vadd.xlane.f32.xlu0 %v1023
    %v1025 = vpop.xlane.xlu0 %1024
    %v1026 = vsel %vm28, %v1022, 0.0
    %1027 = vadd.xlane.f32.xlu0 %v1026
    %v1028 = vpop.xlane.xlu0 %1027
    %v1029 = vmul.f32 %v1025, %v35
    %v1030 = vmul.f32 %v1028, %v35
    %v1031 = vadd.f32 %v1029, 1e-06
    %v1032 = vadd.f32 %v1030, 1e-06
    %v1033 = vrsqrt.pop %v1031
    %v1034 = vrsqrt.pop %v1032
    %v1035 = vmul.f32 %v1019, %v1033
    %v1036 = vmul.f32 %v1020, %v1034
    %v1037 = vlaneseq
    %v1038 = vshrl.u32 %v1037, 7
    %v1039 = vsub.s32 0, %v1038
    %v1040 = vrot.slane %v22, %v1039
    %v1041 = vmul.f32 %v1035, %v1040
    %v1042 = vmul.f32 %v1036, %v1040
    %v1043 = vlaneseq
    %v1044 = vshrl.u32 %v1043, 7
    %v1045 = vsub.s32 0, %v1044
    %v1046 = vrot.slane %v23, %v1045
    %v1047 = vadd.f32 %v1041, %v1046
    %v1048 = vadd.f32 %v1042, %v1046
    %v1049 = vld [vmem:[%s2 + $0x8] sm:$0xff]
    %v1050 = vld [vmem:[%s2 + $0x18] sm:$0xff]
    %v1051 = vld [vmem:[%s2 + $0x28] sm:$0xff]
    %v1052 = vld [vmem:[%s2 + $0x38] sm:$0xff]
    %v1053 = vlaneseq
    %v1054 = vshrl.u32 %v1053, 7
    %v1055 = vsub.s32 0, %v1054
    %v1056 = vrot.slane %v25, %v1055
    %v1058 = vsel %vm28, %v1047, 0
    %v1061 = vsel %vm28, %v1048, 0
    %1063 = vmatprep.subr.mxu0 0.0
    %1064 = vmatpush1.msra.mxu0 %v1049
    %1065 = vmatprep.subr.mxu0 0.0
    %1066 = vmatpush1.msra.mxu0 %v1050
    %1067 = vmatprep.subr.mxu0 0.0
    %1068 = vmatpush1.msra.mxu0 %v1051
    %1069 = vmatprep.subr.mxu0 0.0
    %1070 = vmatpush1.msra.mxu0 %v1052
    %1071 = vmatprep.subr.mxu0 0.0
    %1072 = vmatpush1.msra.mxu0 0.0
    %1073 = vmatprep.subr.mxu0 0.0
    %1074 = vmatpush1.msra.mxu0 0.0
    %1075 = vmatprep.subr.mxu0 0.0
    %1076 = vmatpush1.msra.mxu0 0.0
    %1077 = vmatprep.subr.mxu0 0.0
    %1078 = vmatpush1.msra.mxu0 0.0
    %1079 = vmatprep.subr.mxu0 0.0
    %1080 = vmatpush1.msra.mxu0 0.0
    %1081 = vmatprep.subr.mxu0 0.0
    %1082 = vmatpush1.msra.mxu0 0.0
    %1083 = vmatprep.subr.mxu0 0.0
    %1084 = vmatpush1.msra.mxu0 0.0
    %1085 = vmatprep.subr.mxu0 0.0
    %1086 = vmatpush1.msra.mxu0 0.0
    %1087 = vmatprep.subr.mxu0 0.0
    %1088 = vmatpush1.msra.mxu0 0.0
    %1089 = vmatprep.subr.mxu0 0.0
    %1090 = vmatpush1.msra.mxu0 0.0
    %1091 = vmatprep.subr.mxu0 0.0
    %1092 = vmatpush1.msra.mxu0 0.0
    %1093 = vmatprep.subr.mxu0 0.0
    %1094 = vmatpush1.msra.mxu0 0.0
    %1095 = vmatprep.subr.mxu0 0.0
    %1096 = vmatpush1.msra.mxu0 0.0
    %1097 = vmatprep.subr.mxu0 0.0
    %1098 = vmatpush1.msra.mxu0 0.0
    %1099 = vmatprep.subr.mxu0 0.0
    %1100 = vmatpush1.msra.mxu0 0.0
    %1101 = vmatprep.subr.mxu0 0.0
    %1102 = vmatpush1.msra.mxu0 0.0
    %1103 = vmatprep.subr.mxu0 0.0
    %1104 = vmatpush1.msra.mxu0 0.0
    %1105 = vmatprep.subr.mxu0 0.0
    %1106 = vmatpush1.msra.mxu0 0.0
    %1107 = vmatprep.subr.mxu0 0.0
    %1108 = vmatpush1.msra.mxu0 0.0
    %1109 = vmatprep.subr.mxu0 0.0
    %1110 = vmatpush1.msra.mxu0 0.0
    %1111 = vmatprep.subr.mxu0 0.0
    %1112 = vmatpush1.msra.mxu0 0.0
    %1113 = vmatprep.subr.mxu0 0.0
    %1114 = vmatpush1.msra.mxu0 0.0
    %1115 = vmatprep.subr.mxu0 0.0
    %1116 = vmatpush1.msra.mxu0 0.0
    %1117 = vmatprep.subr.mxu0 0.0
    %1118 = vmatpush1.msra.mxu0 0.0
    %1119 = vmatprep.subr.mxu0 0.0
    %1120 = vmatpush1.msra.mxu0 0.0
    %1121 = vmatprep.subr.mxu0 0.0
    %1122 = vmatpush1.msra.mxu0 0.0
    %1123 = vmatprep.subr.mxu0 0.0
    %1124 = vmatpush1.msra.mxu0 0.0
    %1125 = vmatprep.subr.mxu0 0.0
    %1126 = vmatpush1.msra.mxu0 0.0
    %1127 = vmatprep.mubr.f32.mxu0 0.0
    %1128 = vmatmul.mubr.f32.gmra.mrb[0].mxu0 %v1058
    %v1129 = vpop.f32.mrb[0].mxu0
    %v1130 = vadd.f32 %v1056, %v1129
    %v1131 = vpop.f32.mrb[0].mxu0
    %1132 = vmatprep.mubr.f32.mxu0 0.0
    %1133 = vmatmul.mubr.f32.gmra.mrb[0].mxu0 %v1061
    %v1134 = vpop.f32.mrb[0].mxu0
    %v1135 = vadd.f32 %v1056, %v1134
    %v1136 = vpop.f32.mrb[0].mxu0
    %1137 = vdwg.mxu0
    %v1138 = vmul.f32 %v1130, 0.5
    %v1139 = vmul.f32 %v1135, 0.5
    %v1140 = vmul.f32 %v1130, 0.70710677
    %v1141 = vmul.f32 %v1135, 0.70710677
    %v1142 = verf.f32.pop %v1140
    %v1143 = verf.f32.pop %v1141
    %v1144 = vadd.f32 %v1142, 1.0
    %v1145 = vadd.f32 %v1143, 1.0
    %v1146 = vmul.f32 %v1138, %v1144
    %v1147 = vmul.f32 %v1139, %v1145
    %v1148 = vld [vmem:[%s3] sm:$0xff]
    %v1149 = vld [vmem:[%s3 + $0x8] sm:$0xff]
    %v1150 = vld [vmem:[%s3 + $0x10] sm:$0xff]
    %v1151 = vld [vmem:[%s3 + $0x18] sm:$0xff]
    %v1152 = vld [vmem:[%s3 + $0x20] sm:$0xff]
    %v1153 = vld [vmem:[%s3 + $0x28] sm:$0xff]
    %v1154 = vld [vmem:[%s3 + $0x30] sm:$0xff]
    %v1155 = vld [vmem:[%s3 + $0x38] sm:$0xff]
    %v1156 = vld [vmem:[%s3 + $0x40] sm:$0xff]
    %v1157 = vld [vmem:[%s3 + $0x48] sm:$0xff]
    %v1158 = vld [vmem:[%s3 + $0x50] sm:$0xff]
    %v1159 = vld [vmem:[%s3 + $0x58] sm:$0xff]
    %v1160 = vld [vmem:[%s3 + $0x60] sm:$0xff]
    %v1161 = vld [vmem:[%s3 + $0x68] sm:$0xff]
    %v1162 = vld [vmem:[%s3 + $0x70] sm:$0xff]
    %v1163 = vld [vmem:[%s3 + $0x78] sm:$0xff]
    %v1164 = vlaneseq
    %v1165 = vshrl.u32 %v1164, 7
    %v1166 = vsub.s32 0, %v1165
    %v1167 = vrot.slane %v24, %v1166
    %1168 = vmatprep.subr.mxu0 0.0
    %1169 = vmatpush1.msra.mxu0 %v1148
    %1170 = vmatprep.subr.mxu0 0.0
    %1171 = vmatpush1.msra.mxu0 %v1149
    %1172 = vmatprep.subr.mxu0 0.0
    %1173 = vmatpush1.msra.mxu0 %v1150
    %1174 = vmatprep.subr.mxu0 0.0
    %1175 = vmatpush1.msra.mxu0 %v1151
    %1176 = vmatprep.subr.mxu0 0.0
    %1177 = vmatpush1.msra.mxu0 %v1152
    %1178 = vmatprep.subr.mxu0 0.0
    %1179 = vmatpush1.msra.mxu0 %v1153
    %1180 = vmatprep.subr.mxu0 0.0
    %1181 = vmatpush1.msra.mxu0 %v1154
    %1182 = vmatprep.subr.mxu0 0.0
    %1183 = vmatpush1.msra.mxu0 %v1155
    %1184 = vmatprep.subr.mxu0 0.0
    %1185 = vmatpush1.msra.mxu0 %v1156
    %1186 = vmatprep.subr.mxu0 0.0
    %1187 = vmatpush1.msra.mxu0 %v1157
    %1188 = vmatprep.subr.mxu0 0.0
    %1189 = vmatpush1.msra.mxu0 %v1158
    %1190 = vmatprep.subr.mxu0 0.0
    %1191 = vmatpush1.msra.mxu0 %v1159
    %1192 = vmatprep.subr.mxu0 0.0
    %1193 = vmatpush1.msra.mxu0 %v1160
    %1194 = vmatprep.subr.mxu0 0.0
    %1195 = vmatpush1.msra.mxu0 %v1161
    %1196 = vmatprep.subr.mxu0 0.0
    %1197 = vmatpush1.msra.mxu0 %v1162
    %1198 = vmatprep.subr.mxu0 0.0
    %1199 = vmatpush1.msra.mxu0 %v1163
    %1200 = vmatprep.subr.mxu0 0.0
    %1201 = vmatpush1.msra.mxu0 0.0
    %1202 = vmatprep.subr.mxu0 0.0
    %1203 = vmatpush1.msra.mxu0 0.0
    %1204 = vmatprep.subr.mxu0 0.0
    %1205 = vmatpush1.msra.mxu0 0.0
    %1206 = vmatprep.subr.mxu0 0.0
    %1207 = vmatpush1.msra.mxu0 0.0
    %1208 = vmatprep.subr.mxu0 0.0
    %1209 = vmatpush1.msra.mxu0 0.0
    %1210 = vmatprep.subr.mxu0 0.0
    %1211 = vmatpush1.msra.mxu0 0.0
    %1212 = vmatprep.subr.mxu0 0.0
    %1213 = vmatpush1.msra.mxu0 0.0
    %1214 = vmatprep.subr.mxu0 0.0
    %1215 = vmatpush1.msra.mxu0 0.0
    %1216 = vmatprep.subr.mxu0 0.0
    %1217 = vmatpush1.msra.mxu0 0.0
    %1218 = vmatprep.subr.mxu0 0.0
    %1219 = vmatpush1.msra.mxu0 0.0
    %1220 = vmatprep.subr.mxu0 0.0
    %1221 = vmatpush1.msra.mxu0 0.0
    %1222 = vmatprep.subr.mxu0 0.0
    %1223 = vmatpush1.msra.mxu0 0.0
    %1224 = vmatprep.subr.mxu0 0.0
    %1225 = vmatpush1.msra.mxu0 0.0
    %1226 = vmatprep.subr.mxu0 0.0
    %1227 = vmatpush1.msra.mxu0 0.0
    %1228 = vmatprep.subr.mxu0 0.0
    %1229 = vmatpush1.msra.mxu0 0.0
    %1230 = vmatprep.subr.mxu0 0.0
    %1231 = vmatpush1.msra.mxu0 0.0
    %1232 = vmatprep.mubr.f32.mxu0 0.0
    %1233 = vmatmul.mubr.f32.gmra.mrb[0].mxu0 %v1146
    %v1234 = vpop.f32.mrb[0].mxu0
    %v1235 = vadd.f32 %v1167, %v1234
    %v1236 = vpop.f32.mrb[0].mxu0
    %1237 = vmatprep.mubr.f32.mxu0 0.0
    %1238 = vmatmul.mubr.f32.gmra.mrb[0].mxu0 %v1147
    %v1239 = vpop.f32.mrb[0].mxu0
    %v1240 = vadd.f32 %v1167, %v1239
    %v1241 = vpop.f32.mrb[0].mxu0
    %1242 = vdwg.mxu0
    %v1243 = vadd.f32 %v1009, %v1235
    %v1244 = vadd.f32 %v1010, %v1240
    %1245 = vst.msk [vmem:[#allocation2] sm:$0xff] %vm28, %v1243
    %1246 = vst.msk [vmem:[#allocation2 + $0x8] sm:$0xff] %vm28, %v1244
    // Predicated region
    $region18: #{tpu_custom_call.1} parent=1 // pred_check
      _
    $region19: #{tpu_custom_call.1} parent=1 // pred_check_branch
      %1248 = sbr.rel (0) target = $region21
    $region20: #{tpu_custom_call.1} parent=1 // pred_region
      %s1250 = ssub.s32 256, 256
      %1251 = vsyncadd [#allocation3], %s1250
      %s1252 = sshll.u32 [#allocation2], 4
      %s1253 = int_to_ptr.vmem [resolvable:$true] %s1252
      %1258 = dma.vmem_to_hbm [thread:$0]  %s1253, 256, %s4, [#allocation3], 128, 128, 8
    $region21: #{tpu_custom_call.1} parent=1 // pred_fallthru
      _
    // Predicated region
    $region22: #{tpu_custom_call.1} parent=1 // pred_check
      _
    $region23: #{tpu_custom_call.1} parent=1 // pred_check_branch
      %1260 = sbr.rel (0) target = $region25
    $region24: #{tpu_custom_call.1} parent=1 // pred_region
      %1261 = dma.done [#allocation3], 256
    $region25: #{tpu_custom_call.1} parent=1 // pred_fallthru
      _
    %1262 = vsyncpa [#allocation3], 1

</llo_original>
